<compile_context>
chip_gen: v6e
topology: v6e:2x2x1
jax: 0.10.0
libtpu: 0.0.40
codegen_flags: <defaults>
</compile_context>

<pallas_src>
import jax
import jax.numpy as jnp
import numpy as np
from jax import lax
from jax.experimental import pallas as pl
from jax.experimental.pallas import tpu as pltpu

NEG_SLOPE = 0.01  # torch default leaky_relu slope


def _leaky_relu(x):
    return jnp.where(x > 0, x, NEG_SLOPE * x)


def _hgconv_kernel(ht_ref, emb_ref, h_ref, dinv_ref, binv_ref,
                   whg_ref, bhg_ref, wlin_ref, blin_ref, ginit_ref,
                   out_ref, m_acc, m_bf, g_acc):
    phase = pl.program_id(0)      # 0: node->edge reduction, 1: edge->node + y^T y + epilogue
    i = pl.program_id(1)          # N-tile index
    last = pl.num_programs(1) - 1

    # ----- phase 0: accumulate m0 = H^T X over N tiles (single MXU op per tile) --
    @pl.when(jnp.logical_and(phase == 0, i == 0))
    def _init_m():
        m_acc[...] = jnp.zeros_like(m_acc)

    @pl.when(phase == 0)
    def _phase0():
        # Native last-dim-LHS x first-dim-RHS form: [E, TM] @ [TM, C] -> [E, C].
        m_acc[...] += jnp.dot(ht_ref[...], emb_ref[...],
                              preferred_element_type=jnp.float32)

    # ----- phase transition (runs once): fold W_hg^T and B^-1 into m ------------
    @pl.when(jnp.logical_and(phase == 1, i == 0))
    def _fold():
        # m = B^-1 * (m0 @ W_hg^T)  -- identical to H^T (X W_hg^T) scaled by B^-1.
        mw = lax.dot_general(m_acc[...].astype(jnp.bfloat16), whg_ref[...],
                             (((1,), (1,)), ((), ())),
                             preferred_element_type=jnp.float32)           # [E, C]
        m_bf[...] = (binv_ref[...] * mw).astype(jnp.bfloat16)              # [E, C] bf16
        # g_acc starts at -pad * outer(lrelu(b_hg), lrelu(b_hg)) so padded rows
        # (which see exactly y = lrelu(b_hg)) cancel out of y^T y.
        g_acc[...] = ginit_ref[...]

    # ----- phase 1: y = D^-1 H m + b ; leaky_relu ; accumulate y^T y -------------
    @pl.when(phase == 1)
    def _phase1():
        agg = jnp.dot(h_ref[...], m_bf[...],
                      preferred_element_type=jnp.float32)                  # [TM, C]
        y = _leaky_relu(dinv_ref[...] * agg + bhg_ref[...])                # [TM, C] f32
        yb = y.astype(jnp.bfloat16)
        g_acc[...] += lax.dot_general(yb, yb, (((0,), (0,)), ((), ())),
                                      preferred_element_type=jnp.float32)  # [C, C]

    # ----- finalize: g @ W_lin^T + b_lin ; leaky_relu ----------------------------
    @pl.when(jnp.logical_and(phase == 1, i == last))
    def _finalize():
        z = lax.dot_general(g_acc[...].astype(jnp.bfloat16), wlin_ref[...],
                            (((1,), (1,)), ((), ())),
                            preferred_element_type=jnp.float32) + blin_ref[...]
        out_ref[...] = _leaky_relu(z)


def _choose_tiling(N, E, C, tile_m):
    """Pick (tile_m, n_pad, nt, vmem_est) honoring lane constraints and a v7x-safe VMEM budget."""
    n_pad8 = pl.cdiv(N, 8) * 8
    fixed = (E * C * 4 + E * C * 2 + C * C * 4          # m_acc f32, m_bf bf16, g_acc f32
             + 4 * C * C * 2                            # w_hg / w_lin (bf16) + buffers
             + 3 * C * C * 4 + 4 * C * 4 + E * 4)       # g_init, out, biases, b_inv

    def stream(tm):                                     # double-buffered per-tile streams
        return 2 * (tm * E * 2 + E * tm * 2 + tm * C * 2 + tm * 4)

    if tile_m >= n_pad8:
        tm = n_pad8                                     # single tile covers everything
        return tm, n_pad8, 1, fixed + stream(tm)

    # Keep tile_m a power-of-two multiple of 128 so the H^T block last dim stays lane-dense.
    k = max(1, tile_m // 128)
    k = 1 << (k.bit_length() - 1)
    tm = 128 * k
    budget = 40 << 20                                   # headroom under v7x's 64 MiB VMEM
    while tm > 128 and fixed + stream(tm) > budget:
        tm //= 2
    n_pad = pl.cdiv(N, tm) * tm
    return tm, n_pad, n_pad // tm, fixed + stream(tm)


def node2vec_hypergraph_conv(emb, hyperedge_index, num_edges,
                             w_hg, b_hg, w_lin, b_lin, *, tile_m=256):
    """Forward pass. emb [N,C] f32; hyperedge_index [2,nnz] int32; returns [C,C] f32."""
    N, C = emb.shape
    E = int(num_edges)
    node_idx = hyperedge_index[0]
    edge_idx = hyperedge_index[1]
    nnz = node_idx.shape[0]

    # Degree normalization hoisted out of the kernel (O(nnz) segment sums).
    ones = jnp.ones((nnz,), jnp.float32)
    deg_n = jax.ops.segment_sum(ones, node_idx, num_segments=N)
    deg_e = jax.ops.segment_sum(ones, edge_idx, num_segments=E)
    d_inv = jnp.where(deg_n > 0, 1.0 / deg_n, 0.0).reshape(N, 1)
    b_inv = jnp.where(deg_e > 0, 1.0 / deg_e, 0.0).reshape(E, 1)   # [E,1]: folded into m rows

    # Dense incidence matrix (bf16 is exact for 0/1 multiplicities <= 256).
    H = jnp.zeros((N, E), jnp.float32).at[node_idx, edge_idx].add(1.0)

    tile_m, n_pad, nt, vmem_est = _choose_tiling(N, E, C, tile_m)
    pad = n_pad - N
    if pad:
        emb = jnp.pad(emb, ((0, pad), (0, 0)))
        H = jnp.pad(H, ((0, pad), (0, 0)))
        d_inv = jnp.pad(d_inv, ((0, pad), (0, 0)))
    Ht = H.T                                             # [E, n_pad]; one-time XLA transpose

    # bf16 MXU operands (f32 accumulation inside the kernel).
    emb_bf = emb.astype(jnp.bfloat16)
    h_bf = H.astype(jnp.bfloat16)
    ht_bf = Ht.astype(jnp.bfloat16)
    whg_bf = w_hg.astype(jnp.bfloat16)
    wlin_bf = w_lin.astype(jnp.bfloat16)
    bhg = b_hg.reshape(1, C).astype(jnp.float32)
    blin = b_lin.reshape(1, C).astype(jnp.float32)

    # Padded rows contribute exactly outer(lrelu(b_hg), lrelu(b_hg)) each to y^T y;
    # pre-subtract that constant by initializing the g accumulator with it.
    lb = _leaky_relu(bhg)
    g_init = (-float(pad)) * (lb.T @ lb)                 # [C, C] f32 (zeros when pad == 0)

    vmem_limit = int(min(max(2 * vmem_est, 32 << 20), 56 << 20))

    grid = (2, nt)  # (phase, N-tiles); both axes carry accumulator deps -> arbitrary.
    return pl.pallas_call(
        _hgconv_kernel,
        out_shape=jax.ShapeDtypeStruct((C, C), jnp.float32),
        grid_spec=pltpu.PrefetchScalarGridSpec(
            num_scalar_prefetch=0,
            grid=grid,
            in_specs=[
                # H^T only read in phase 0; constant block index in phase 1 avoids refetch.
                pl.BlockSpec((E, tile_m), lambda p, i: (0, (1 - p) * i)),   # H^T
                pl.BlockSpec((tile_m, C), lambda p, i: ((1 - p) * i, 0)),   # emb
                # H / d_inv only read in phase 1; pinned to block 0 during phase 0.
                pl.BlockSpec((tile_m, E), lambda p, i: (p * i, 0)),         # H
                pl.BlockSpec((tile_m, 1), lambda p, i: (p * i, 0)),         # d_inv
                pl.BlockSpec((E, 1), lambda p, i: (0, 0)),                  # b_inv
                pl.BlockSpec((C, C), lambda p, i: (0, 0)),                  # w_hg
                pl.BlockSpec((1, C), lambda p, i: (0, 0)),                  # b_hg
                pl.BlockSpec((C, C), lambda p, i: (0, 0)),                  # w_lin
                pl.BlockSpec((1, C), lambda p, i: (0, 0)),                  # b_lin
                pl.BlockSpec((C, C), lambda p, i: (0, 0)),                  # g_init
            ],
            out_specs=pl.BlockSpec((C, C), lambda p, i: (0, 0)),
            scratch_shapes=[pltpu.VMEM((E, C), jnp.float32),    # m accumulator (phase 0)
                            pltpu.VMEM((E, C), jnp.bfloat16),   # folded m, bf16 (phase 1 operand)
                            pltpu.VMEM((C, C), jnp.float32)],   # y^T y accumulator
        ),
        compiler_params=pltpu.CompilerParams(
            dimension_semantics=("arbitrary", "arbitrary"),
            vmem_limit_bytes=vmem_limit),
    )(ht_bf, emb_bf, h_bf, d_inv, b_inv, whg_bf, bhg, wlin_bf, blin, g_init)


def _reference(emb, H, d_inv, b_inv, w_hg, b_hg, w_lin, b_lin):
    """Pure-JAX f32 reference of the same forward pass."""
    xw = emb @ w_hg.T
    m = b_inv.T * (H.T @ xw)
    y = d_inv * (H @ m) + b_hg.reshape(1, -1)
    y = _leaky_relu(y)
    g = y.T @ y
    z = g @ w_lin.T + b_lin.reshape(1, -1)
    return _leaky_relu(z)


if __name__ == "__main__":
    # Small but lane-dense synthetic problem: N nodes, E hyperedges, C channels.
    N, E, C, NNZ = 256, 128, 128, 1024

    key = jax.random.PRNGKey(0)
    k_emb, k_ni, k_ei, k_whg, k_bhg, k_wlin, k_blin = jax.random.split(key, 7)

    # Node2Vec embedding table (Node2Vec walk training is irrelevant to the
    # forward graph — forward() just returns the table).
    emb = jax.random.normal(k_emb, (N, C), jnp.float32) * 0.1

    # Sparse hyperedge index [2, nnz]: row 0 = node ids, row 1 = hyperedge ids.
    node_idx = jax.random.randint(k_ni, (NNZ,), 0, N, jnp.int32)
    edge_idx = jax.random.randint(k_ei, (NNZ,), 0, E, jnp.int32)
    hyperedge_index = jnp.stack([node_idx, edge_idx], axis=0)

    # HypergraphConv linear weight (bias=False inside lin, separate conv bias).
    w_hg = jax.random.normal(k_whg, (C, C), jnp.float32) * 0.1
    b_hg = jax.random.normal(k_bhg, (C,), jnp.float32) * 0.01

    # Final nn.Linear(C, C) parameters.
    w_lin = jax.random.normal(k_wlin, (C, C), jnp.float32) * 0.1
    b_lin = jax.random.normal(k_blin, (C,), jnp.float32) * 0.01

    out = node2vec_hypergraph_conv(emb, hyperedge_index, E,
                                   w_hg, b_hg, w_lin, b_lin, tile_m=256)
    out = jax.block_until_ready(out)
    assert out.shape == (C, C) and out.dtype == jnp.float32

    # Loose-tolerance correctness check against an f32 reference (kernel feeds
    # bf16 MXU operands with f32 accumulation -> ~1% relative error expected).
    H = jnp.zeros((N, E), jnp.float32).at[node_idx, edge_idx].add(1.0)
    deg_n = H.sum(axis=1, keepdims=True)
    deg_e = H.sum(axis=0, keepdims=True)
    d_inv = jnp.where(deg_n > 0, 1.0 / deg_n, 0.0)
    b_inv = jnp.where(deg_e > 0, 1.0 / deg_e, 0.0)
    ref = _reference(emb, H, d_inv, b_inv, w_hg, b_hg, w_lin, b_lin)
    scale = float(jnp.max(jnp.abs(ref)))
    np.testing.assert_allclose(np.asarray(out), np.asarray(ref),
                               rtol=0.1, atol=0.05 * scale)

    # TODO(synk): Node2Vec random-walk sampling / training loss has no Pallas
    # equivalent here; only its forward() (embedding lookup) is reproduced.
    print("KERNEL_OK")
</pallas_src>

<mosaic_0001>
module attributes {stable_mosaic.version = 11 : i64} {
  func.func @_hgconv_kernel(%arg0: i32, %arg1: i32, %arg2: memref<128x256xbf16, #tpu.memory_space<vmem>>, %arg3: memref<256x128xbf16, #tpu.memory_space<vmem>>, %arg4: memref<256x128xbf16, #tpu.memory_space<vmem>>, %arg5: memref<256x1xf32, #tpu.memory_space<vmem>>, %arg6: memref<128x1xf32, #tpu.memory_space<vmem>>, %arg7: memref<128x128xbf16, #tpu.memory_space<vmem>>, %arg8: memref<1x128xf32, #tpu.memory_space<vmem>>, %arg9: memref<128x128xbf16, #tpu.memory_space<vmem>>, %arg10: memref<1x128xf32, #tpu.memory_space<vmem>>, %arg11: memref<128x128xf32, #tpu.memory_space<vmem>>, %arg12: memref<128x128xf32, #tpu.memory_space<vmem>>, %arg13: memref<128x128xf32, #tpu.memory_space<vmem>>, %arg14: memref<128x128xbf16, #tpu.memory_space<vmem>>, %arg15: memref<128x128xf32, #tpu.memory_space<vmem>>) attributes {dimension_semantics = [#tpu.dimension_semantics<arbitrary>, #tpu.dimension_semantics<arbitrary>], iteration_bounds = array<i64: 2, 1>, scalar_prefetch = 0 : i64, scratch_operands = 3 : i64, tpu.core_type = #tpu.core_type<tc>, window_params = [{transform_indices = @transform_0, window_bounds = array<i64: 128, 256>}, {transform_indices = @transform_1, window_bounds = array<i64: 256, 128>}, {transform_indices = @transform_2, window_bounds = array<i64: 256, 128>}, {transform_indices = @transform_3, window_bounds = array<i64: 256, 1>}, {pipeline_mode = #tpu.pipeline_mode<synchronous>, transform_indices = @transform_4, window_bounds = array<i64: 128, 1>}, {pipeline_mode = #tpu.pipeline_mode<synchronous>, transform_indices = @transform_5, window_bounds = array<i64: 128, 128>}, {pipeline_mode = #tpu.pipeline_mode<synchronous>, transform_indices = @transform_6, window_bounds = array<i64: 1, 128>}, {pipeline_mode = #tpu.pipeline_mode<synchronous>, transform_indices = @transform_7, window_bounds = array<i64: 128, 128>}, {pipeline_mode = #tpu.pipeline_mode<synchronous>, transform_indices = @transform_8, window_bounds = array<i64: 1, 128>}, {pipeline_mode = #tpu.pipeline_mode<synchronous>, transform_indices = @transform_9, window_bounds = array<i64: 128, 128>}, {pipeline_mode = #tpu.pipeline_mode<synchronous>, transform_indices = @transform_10, window_bounds = array<i64: 128, 128>}]} {
    %c0_i32 = arith.constant 0 : i32
    %0 = arith.cmpi eq, %arg0, %c0_i32 : i32
    %c0_i32_0 = arith.constant 0 : i32
    %1 = arith.cmpi eq, %arg1, %c0_i32_0 : i32
    %2 = arith.andi %0, %1 : i1
    %3 = arith.extui %2 : i1 to i32
    %c0_i32_1 = arith.constant 0 : i32
    %4 = arith.cmpi ne, %3, %c0_i32_1 : i32
    scf.if %4 {
      %cst = arith.constant 0.000000e+00 : f32
      %21 = vector.broadcast %cst : f32 to vector<128x128xf32>
      %c0 = arith.constant 0 : index
      %c0_11 = arith.constant 0 : index
      %22 = vector.load %arg13[%c0, %c0_11] : memref<128x128xf32, #tpu.memory_space<vmem>>, vector<128x128xf32>
      tpu.vector_store %arg13[%c0, %c0_11], %21 {strides = array<i32>} : memref<128x128xf32, #tpu.memory_space<vmem>>, vector<128x128xf32>,
    } else {
    }
    %c0_i32_2 = arith.constant 0 : i32
    %5 = arith.cmpi eq, %arg0, %c0_i32_2 : i32
    %6 = arith.extui %5 : i1 to i32
    %c0_i32_3 = arith.constant 0 : i32
    %7 = arith.cmpi ne, %6, %c0_i32_3 : i32
    scf.if %7 {
      %c0 = arith.constant 0 : index
      %c0_11 = arith.constant 0 : index
      %21 = vector.load %arg13[%c0, %c0_11] : memref<128x128xf32, #tpu.memory_space<vmem>>, vector<128x128xf32>
      %c0_12 = arith.constant 0 : index
      %c0_13 = arith.constant 0 : index
      %22 = vector.load %arg2[%c0_12, %c0_13] : memref<128x256xbf16, #tpu.memory_space<vmem>>, vector<128x256xbf16>
      %c0_14 = arith.constant 0 : index
      %c0_15 = arith.constant 0 : index
      %23 = vector.load %arg3[%c0_14, %c0_15] : memref<256x128xbf16, #tpu.memory_space<vmem>>, vector<256x128xbf16>
      %cst = arith.constant dense<0.000000e+00> : vector<128x128xf32>
      %24 = tpu.matmul %22, %23, %cst {dimension_numbers = #tpu.dot_dimension_numbers<[1], [0], [0], [1], [0, 0, 1, 1], [], []>} : vector<128x256xbf16>, vector<256x128xbf16>, vector<128x128xf32> -> vector<128x128xf32>
      %25 = arith.addf %21, %24 : vector<128x128xf32>
      %c0_16 = arith.constant 0 : index
      %c0_17 = arith.constant 0 : index
      %26 = vector.load %arg13[%c0_16, %c0_17] : memref<128x128xf32, #tpu.memory_space<vmem>>, vector<128x128xf32>
      tpu.vector_store %arg13[%c0_16, %c0_17], %25 {strides = array<i32>} : memref<128x128xf32, #tpu.memory_space<vmem>>, vector<128x128xf32>,
    } else {
    }
    %c1_i32 = arith.constant 1 : i32
    %8 = arith.cmpi eq, %arg0, %c1_i32 : i32
    %c0_i32_4 = arith.constant 0 : i32
    %9 = arith.cmpi eq, %arg1, %c0_i32_4 : i32
    %10 = arith.andi %8, %9 : i1
    %11 = arith.extui %10 : i1 to i32
    %c0_i32_5 = arith.constant 0 : i32
    %12 = arith.cmpi ne, %11, %c0_i32_5 : i32
    scf.if %12 {
      %c0 = arith.constant 0 : index
      %c0_11 = arith.constant 0 : index
      %21 = vector.load %arg13[%c0, %c0_11] : memref<128x128xf32, #tpu.memory_space<vmem>>, vector<128x128xf32>
      %22 = arith.truncf %21 : vector<128x128xf32> to vector<128x128xbf16>
      %c0_12 = arith.constant 0 : index
      %c0_13 = arith.constant 0 : index
      %23 = vector.load %arg7[%c0_12, %c0_13] : memref<128x128xbf16, #tpu.memory_space<vmem>>, vector<128x128xbf16>
      %cst = arith.constant dense<0.000000e+00> : vector<128x128xf32>
      %24 = tpu.matmul %22, %23, %cst {dimension_numbers = #tpu.dot_dimension_numbers<[1], [1], [0], [0], [0, 0, 1, 0], [], []>} : vector<128x128xbf16>, vector<128x128xbf16>, vector<128x128xf32> -> vector<128x128xf32>
      %c0_14 = arith.constant 0 : index
      %c0_15 = arith.constant 0 : index
      %25 = vector.load %arg6[%c0_14, %c0_15] : memref<128x1xf32, #tpu.memory_space<vmem>>, vector<128x1xf32>
      %26 = vector.broadcast %25 : vector<128x1xf32> to vector<128x128xf32>
      %27 = arith.mulf %26, %24 : vector<128x128xf32>
      %28 = arith.truncf %27 : vector<128x128xf32> to vector<128x128xbf16>
      %c0_16 = arith.constant 0 : index
      %c0_17 = arith.constant 0 : index
      %29 = vector.load %arg14[%c0_16, %c0_17] : memref<128x128xbf16, #tpu.memory_space<vmem>>, vector<128x128xbf16>
      tpu.vector_store %arg14[%c0_16, %c0_17], %28 {strides = array<i32>} : memref<128x128xbf16, #tpu.memory_space<vmem>>, vector<128x128xbf16>,
      %c0_18 = arith.constant 0 : index
      %c0_19 = arith.constant 0 : index
      %30 = vector.load %arg11[%c0_18, %c0_19] : memref<128x128xf32, #tpu.memory_space<vmem>>, vector<128x128xf32>
      %c0_20 = arith.constant 0 : index
      %c0_21 = arith.constant 0 : index
      %31 = vector.load %arg15[%c0_20, %c0_21] : memref<128x128xf32, #tpu.memory_space<vmem>>, vector<128x128xf32>
      tpu.vector_store %arg15[%c0_20, %c0_21], %30 {strides = array<i32>} : memref<128x128xf32, #tpu.memory_space<vmem>>, vector<128x128xf32>,
    } else {
    }
    %c1_i32_6 = arith.constant 1 : i32
    %13 = arith.cmpi eq, %arg0, %c1_i32_6 : i32
    %14 = arith.extui %13 : i1 to i32
    %c0_i32_7 = arith.constant 0 : i32
    %15 = arith.cmpi ne, %14, %c0_i32_7 : i32
    scf.if %15 {
      %c0 = arith.constant 0 : index
      %c0_11 = arith.constant 0 : index
      %21 = vector.load %arg4[%c0, %c0_11] : memref<256x128xbf16, #tpu.memory_space<vmem>>, vector<256x128xbf16>
      %c0_12 = arith.constant 0 : index
      %c0_13 = arith.constant 0 : index
      %22 = vector.load %arg14[%c0_12, %c0_13] : memref<128x128xbf16, #tpu.memory_space<vmem>>, vector<128x128xbf16>
      %cst = arith.constant dense<0.000000e+00> : vector<256x128xf32>
      %23 = tpu.matmul %21, %22, %cst {dimension_numbers = #tpu.dot_dimension_numbers<[1], [0], [0], [1], [0, 0, 1, 1], [], []>} : vector<256x128xbf16>, vector<128x128xbf16>, vector<256x128xf32> -> vector<256x128xf32>
      %c0_14 = arith.constant 0 : index
      %c0_15 = arith.constant 0 : index
      %24 = vector.load %arg5[%c0_14, %c0_15] : memref<256x1xf32, #tpu.memory_space<vmem>>, vector<256x1xf32>
      %25 = vector.broadcast %24 : vector<256x1xf32> to vector<256x128xf32>
      %26 = arith.mulf %25, %23 : vector<256x128xf32>
      %c0_16 = arith.constant 0 : index
      %c0_17 = arith.constant 0 : index
      %27 = vector.load %arg8[%c0_16, %c0_17] : memref<1x128xf32, #tpu.memory_space<vmem>>, vector<1x128xf32>
      %28 = vector.broadcast %27 : vector<1x128xf32> to vector<256x128xf32>
      %29 = arith.addf %26, %28 : vector<256x128xf32>
      %cst_18 = arith.constant 0.000000e+00 : f32
      %30 = vector.broadcast %cst_18 : f32 to vector<256x128xf32>
      %31 = arith.cmpf ogt, %29, %30 : vector<256x128xf32>
      %cst_19 = arith.constant 0.00999999977 : f32
      %32 = vector.broadcast %cst_19 : f32 to vector<256x128xf32>
      %33 = arith.mulf %32, %29 : vector<256x128xf32>
      %34 = arith.select %31, %29, %33 : vector<256x128xi1>, vector<256x128xf32>
      %35 = arith.truncf %34 : vector<256x128xf32> to vector<256x128xbf16>
      %c0_20 = arith.constant 0 : index
      %c0_21 = arith.constant 0 : index
      %36 = vector.load %arg15[%c0_20, %c0_21] : memref<128x128xf32, #tpu.memory_space<vmem>>, vector<128x128xf32>
      %cst_22 = arith.constant dense<0.000000e+00> : vector<128x128xf32>
      %37 = tpu.matmul %35, %35, %cst_22 {dimension_numbers = #tpu.dot_dimension_numbers<[0], [0], [1], [1], [0, 1, 1, 1], [], []>} : vector<256x128xbf16>, vector<256x128xbf16>, vector<128x128xf32> -> vector<128x128xf32>
      %38 = arith.addf %36, %37 : vector<128x128xf32>
      %c0_23 = arith.constant 0 : index
      %c0_24 = arith.constant 0 : index
      %39 = vector.load %arg15[%c0_23, %c0_24] : memref<128x128xf32, #tpu.memory_space<vmem>>, vector<128x128xf32>
      tpu.vector_store %arg15[%c0_23, %c0_24], %38 {strides = array<i32>} : memref<128x128xf32, #tpu.memory_space<vmem>>, vector<128x128xf32>,
    } else {
    }
    %c1_i32_8 = arith.constant 1 : i32
    %16 = arith.cmpi eq, %arg0, %c1_i32_8 : i32
    %c0_i32_9 = arith.constant 0 : i32
    %17 = arith.cmpi eq, %arg1, %c0_i32_9 : i32
    %18 = arith.andi %16, %17 : i1
    %19 = arith.extui %18 : i1 to i32
    %c0_i32_10 = arith.constant 0 : i32
    %20 = arith.cmpi ne, %19, %c0_i32_10 : i32
    scf.if %20 {
      %c0 = arith.constant 0 : index
      %c0_11 = arith.constant 0 : index
      %21 = vector.load %arg15[%c0, %c0_11] : memref<128x128xf32, #tpu.memory_space<vmem>>, vector<128x128xf32>
      %22 = arith.truncf %21 : vector<128x128xf32> to vector<128x128xbf16>
      %c0_12 = arith.constant 0 : index
      %c0_13 = arith.constant 0 : index
      %23 = vector.load %arg9[%c0_12, %c0_13] : memref<128x128xbf16, #tpu.memory_space<vmem>>, vector<128x128xbf16>
      %cst = arith.constant dense<0.000000e+00> : vector<128x128xf32>
      %24 = tpu.matmul %22, %23, %cst {dimension_numbers = #tpu.dot_dimension_numbers<[1], [1], [0], [0], [0, 0, 1, 0], [], []>} : vector<128x128xbf16>, vector<128x128xbf16>, vector<128x128xf32> -> vector<128x128xf32>
      %c0_14 = arith.constant 0 : index
      %c0_15 = arith.constant 0 : index
      %25 = vector.load %arg10[%c0_14, %c0_15] : memref<1x128xf32, #tpu.memory_space<vmem>>, vector<1x128xf32>
      %26 = vector.broadcast %25 : vector<1x128xf32> to vector<128x128xf32>
      %27 = arith.addf %24, %26 : vector<128x128xf32>
      %cst_16 = arith.constant 0.000000e+00 : f32
      %28 = vector.broadcast %cst_16 : f32 to vector<128x128xf32>
      %29 = arith.cmpf ogt, %27, %28 : vector<128x128xf32>
      %cst_17 = arith.constant 0.00999999977 : f32
      %30 = vector.broadcast %cst_17 : f32 to vector<128x128xf32>
      %31 = arith.mulf %30, %27 : vector<128x128xf32>
      %32 = arith.select %29, %27, %31 : vector<128x128xi1>, vector<128x128xf32>
      %c0_18 = arith.constant 0 : index
      %c0_19 = arith.constant 0 : index
      %33 = vector.load %arg12[%c0_18, %c0_19] : memref<128x128xf32, #tpu.memory_space<vmem>>, vector<128x128xf32>
      tpu.vector_store %arg12[%c0_18, %c0_19], %32 {strides = array<i32>} : memref<128x128xf32, #tpu.memory_space<vmem>>, vector<128x128xf32>,
    } else {
    }
    return
  }
  func.func @transform_0(%arg0: i32, %arg1: i32) -> (i32, i32) {
    %c1_i32 = arith.constant 1 : i32
    %0 = arith.subi %c1_i32, %arg0 : i32
    %1 = arith.muli %0, %arg1 : i32
    %c0_i32 = arith.constant 0 : i32
    %c0_i32_0 = arith.constant 0 : i32
    return %c0_i32, %1 : i32, i32
  }
  func.func @transform_1(%arg0: i32, %arg1: i32) -> (i32, i32) {
    %c1_i32 = arith.constant 1 : i32
    %0 = arith.subi %c1_i32, %arg0 : i32
    %1 = arith.muli %0, %arg1 : i32
    %c0_i32 = arith.constant 0 : i32
    %c0_i32_0 = arith.constant 0 : i32
    return %1, %c0_i32 : i32, i32
  }
  func.func @transform_2(%arg0: i32, %arg1: i32) -> (i32, i32) {
    %0 = arith.muli %arg0, %arg1 : i32
    %c0_i32 = arith.constant 0 : i32
    %c0_i32_0 = arith.constant 0 : i32
    return %0, %c0_i32 : i32, i32
  }
  func.func @transform_3(%arg0: i32, %arg1: i32) -> (i32, i32) {
    %0 = arith.muli %arg0, %arg1 : i32
    %c0_i32 = arith.constant 0 : i32
    %c0_i32_0 = arith.constant 0 : i32
    return %0, %c0_i32 : i32, i32
  }
  func.func @transform_4(%arg0: i32, %arg1: i32) -> (i32, i32) {
    %c0_i32 = arith.constant 0 : i32
    %c0_i32_0 = arith.constant 0 : i32
    %c0_i32_1 = arith.constant 0 : i32
    return %c0_i32, %c0_i32_0 : i32, i32
  }
  func.func @transform_5(%arg0: i32, %arg1: i32) -> (i32, i32) {
    %c0_i32 = arith.constant 0 : i32
    %c0_i32_0 = arith.constant 0 : i32
    %c0_i32_1 = arith.constant 0 : i32
    return %c0_i32, %c0_i32_0 : i32, i32
  }
  func.func @transform_6(%arg0: i32, %arg1: i32) -> (i32, i32) {
    %c0_i32 = arith.constant 0 : i32
    %c0_i32_0 = arith.constant 0 : i32
    %c0_i32_1 = arith.constant 0 : i32
    return %c0_i32, %c0_i32_0 : i32, i32
  }
  func.func @transform_7(%arg0: i32, %arg1: i32) -> (i32, i32) {
    %c0_i32 = arith.constant 0 : i32
    %c0_i32_0 = arith.constant 0 : i32
    %c0_i32_1 = arith.constant 0 : i32
    return %c0_i32, %c0_i32_0 : i32, i32
  }
  func.func @transform_8(%arg0: i32, %arg1: i32) -> (i32, i32) {
    %c0_i32 = arith.constant 0 : i32
    %c0_i32_0 = arith.constant 0 : i32
    %c0_i32_1 = arith.constant 0 : i32
    return %c0_i32, %c0_i32_0 : i32, i32
  }
  func.func @transform_9(%arg0: i32, %arg1: i32) -> (i32, i32) {
    %c0_i32 = arith.constant 0 : i32
    %c0_i32_0 = arith.constant 0 : i32
    %c0_i32_1 = arith.constant 0 : i32
    return %c0_i32, %c0_i32_0 : i32, i32
  }
  func.func @transform_10(%arg0: i32, %arg1: i32) -> (i32, i32) {
    %c0_i32 = arith.constant 0 : i32
    %c0_i32_0 = arith.constant 0 : i32
    %c0_i32_1 = arith.constant 0 : i32
    return %c0_i32, %c0_i32_0 : i32, i32
  }
}

</mosaic_0001>

<llo_original>
// kernel: tpu_custom_call.1
$region0: #{tpu_custom_call.1}
  #allocation0 [shape = 'u32[]', space=smem, size = 0x4, offset = 0x4, fixed_abs, tag = 'smem constant byte address 0x4 - core index']
  #allocation1 [shape = 'u32[144,128]{1,0:T(1,128)}', space=vmem, size = 0x12000, scoped, tag = 'internal scratch']
  #allocation2 [shape = 'f32[128,128]{1,0:T(8,128)}', space=vmem, size = 0x10000, scoped, tag = 'scratch operand']
  #allocation3 [shape = 'bf16[128,128]{1,0:T(8,128)(2,1)}', space=vmem, size = 0x8000, scoped, tag = 'scratch operand']
  #allocation4 [shape = 'f32[128,128]{1,0:T(8,128)}', space=vmem, size = 0x10000, scoped, tag = 'scratch operand']
  %s0 = inlined_call_operand.vmem [shape: bf16[128,256], index: 0, kind: input, shape index: {}]
  %s1 = inlined_call_operand.vmem [shape: bf16[256,128], index: 1, kind: input, shape index: {}]
  %s2 = inlined_call_operand.vmem [shape: bf16[256,128], index: 2, kind: input, shape index: {}]
  %s3 = inlined_call_operand.vmem [shape: f32[256,1], index: 3, kind: input, shape index: {}]
  %s4 = inlined_call_operand.vmem [shape: f32[128,1], index: 4, kind: input, shape index: {}]
  %s5 = inlined_call_operand.hbm [shape: bf16[128,128], index: 5, kind: input, shape index: {}]
  %s6 = inlined_call_operand.vmem [shape: f32[1,128], index: 6, kind: input, shape index: {}]
  %s7 = inlined_call_operand.hbm [shape: bf16[128,128], index: 7, kind: input, shape index: {}]
  %s8 = inlined_call_operand.vmem [shape: f32[1,128], index: 8, kind: input, shape index: {}]
  %s9 = inlined_call_operand.hbm [shape: f32[128,128], index: 9, kind: input, shape index: {}]
  %s10 = inlined_call_operand.hbm [shape: f32[128,128], index: 10, kind: output, shape index: {}]
  %s11 = sld [smem:[#allocation0]]
  $region105: #{tpu_custom_call.1} parent=0
    _
  %s13 = ssub.s32 1, %s11
  %s14 = scalar_select 0, %s13, %s11
  $region1: #{tpu_custom_call.1} parent=0
    #allocation5 [shape = 'u8[32768]{0}', space=vmem, size = 0x8000, scoped, tag = 'input window, operand 5, single buffered']
    #allocation6 [shape = 's32[2]{0}', space=sflag, size = 0x8, scoped, tag = 'scoped memory for tpu_custom_call.1']
    #allocation7 [shape = 's32[2]{0}', space=sflag, size = 0x8, scoped, tag = 'scoped memory for tpu_custom_call.1']
    #allocation8 [shape = 'u8[32768]{0}', space=vmem, size = 0x8000, scoped, tag = 'input window, operand 7, single buffered']
    #allocation9 [shape = 's32[1]{0}', space=sflag, size = 0x4, scoped, tag = 'scoped memory for tpu_custom_call.1']
    #allocation10 [shape = 'u8[65536]{0}', space=vmem, size = 0x10000, scoped, tag = 'input window, operand 9, single buffered']
    #allocation11 [shape = 'u8[65536]{0}', space=vmem, size = 0x10000, scoped, tag = 'output window, operand 0, single buffered']
    %15 = vsyncpa [#allocation6], 0
    %16 = vsyncpa [#allocation9], 0
    %17 = vsyncpa [#allocation7], 0
    loop: start=0, step=1, limit=4
    $region2: #{tpu_custom_call.1} parent=1 // loop_pre_header
      _
    $region3: #{tpu_custom_call.1} parent=1 // loop_header
      %s19 = sphi 0, %s23
      %p20 = scmp.ge.s32.totalorder %s19, 4
      %s26 = sphi 0, %s38
      %s27 = sphi 0, %s34
      %s28 = sphi 0, %s26
      %s29 = sphi 0, %s27
      %s30 = sphi 0, %s28
      %s31 = sphi 0, %s29
      %s45 = sphi 0, %s47
      %s48 = sphi 0, %s45
      %s49 = sphi 0, %s48
      %s65 = sphi 0, %s49
      %s75 = sphi 0, %s77
      %s78 = sphi 0, %s75
      %s79 = sphi 0, %s78
      %s95 = sphi 0, %s79
      %s103 = sphi 0, %s105
      %s106 = sphi 0, %s103
      %s107 = sphi 0, %s106
      %s123 = sphi 0, %s107
      %s131 = sphi 0, %s133
      %s134 = sphi 0, %s131
      %s135 = sphi 0, %s134
      %s151 = sphi 0, %s135
      %s155 = sphi 0, %s155
      %s157 = sphi 0, %s155
      %s158 = sphi 0, %s157
      %s172 = sphi 0, %s158
      %s176 = sphi 0, %s176
      %s178 = sphi 0, %s176
      %s179 = sphi 0, %s178
      %s193 = sphi 0, %s179
      %s197 = sphi 0, %s197
      %s199 = sphi 0, %s197
      %s200 = sphi 0, %s199
      %s214 = sphi 0, %s200
      %s218 = sphi 0, %s218
      %s220 = sphi 0, %s218
      %s221 = sphi 0, %s220
      %s235 = sphi 0, %s221
      %s239 = sphi 0, %s239
      %s241 = sphi 0, %s239
      %s242 = sphi 0, %s241
      %s256 = sphi 0, %s242
      %s260 = sphi 0, %s260
      %s262 = sphi 0, %s260
      %s263 = sphi 0, %s262
      %s277 = sphi 0, %s263
      %s281 = sphi 0, %s281
      %s283 = sphi 0, %s281
      %s284 = sphi 0, %s283
      %s298 = sphi 0, %s284
    $region4: #{tpu_custom_call.1} parent=1 // loop_header_branch
      %22 = sbr.rel (%p20) target = $region8
    $region5: #{tpu_custom_call.1} parent=1 // loop_body
      %s24 = ssub.s32 %s19, 1
      %s25 = ssub.s32 %s19, 2
      %s32 = sadd.s32 1, %s27
      %p33 = scmp.ge.s32.totalorder %s32, 1
      %s34 = scalar_select %p33, 0, %s32
      %s35 = sadd.s32 1, %s26
      %s36 = scalar_select %p33, %s35, %s26
      %p37 = scmp.ge.s32.totalorder %s36, 2
      %s38 = scalar_select %p37, 0, %s36
      %s39 = ssub.s32 1, %s26
      %s40 = smul.u32 %s39, %s27
      %s41 = ssub.s32 1, %s38
      %s42 = smul.u32 %s41, %s34
      %s43 = ssub.s32 %s40, %s42
      %p44 = scmp.eq.s32.totalorder %s43, 0
      %s46 = sadd.s32 %s45, 1
      %s47 = scalar_select %p44, %s45, %s46
      %p50 = pneg %p44
      %p51 = scmp.eq.s32.totalorder %s19, 1
      %p52 = por %p50, %p51
      %p53 = scmp.ne.s32.totalorder %s45, %s48
      %p54 = scmp.eq.s32.totalorder %s19, 0
      %p55 = por %p53, %p54
      %p56 = scmp.ne.s32.totalorder %s45, %s48
      %p57 = scmp.eq.s32.totalorder %s24, 1
      %p58 = por %p56, %p57
      %p59 = scmp.ne.s32.totalorder %s48, %s49
      %p60 = scmp.eq.s32.totalorder %s24, 0
      %p61 = por %p59, %p60
      %p62 = scmp.ne.s32.totalorder %s48, %s49
      %p63 = scmp.eq.s32.totalorder %s25, 1
      %p64 = por %p62, %p63
      %p66 = scmp.ne.s32.totalorder %s49, %s65
      %p67 = scmp.eq.s32.totalorder %s25, 0
      %p68 = por %p66, %p67
      %s69 = ssub.s32 1, %s26
      %s70 = smul.u32 %s69, %s27
      %s71 = ssub.s32 1, %s38
      %s72 = smul.u32 %s71, %s34
      %s73 = ssub.s32 %s70, %s72
      %p74 = scmp.eq.s32.totalorder %s73, 0
      %s76 = sadd.s32 %s75, 1
      %s77 = scalar_select %p74, %s75, %s76
      %p80 = pneg %p74
      %p81 = scmp.eq.s32.totalorder %s19, 1
      %p82 = por %p80, %p81
      %p83 = scmp.ne.s32.totalorder %s75, %s78
      %p84 = scmp.eq.s32.totalorder %s19, 0
      %p85 = por %p83, %p84
      %p86 = scmp.ne.s32.totalorder %s75, %s78
      %p87 = scmp.eq.s32.totalorder %s24, 1
      %p88 = por %p86, %p87
      %p89 = scmp.ne.s32.totalorder %s78, %s79
      %p90 = scmp.eq.s32.totalorder %s24, 0
      %p91 = por %p89, %p90
      %p92 = scmp.ne.s32.totalorder %s78, %s79
      %p93 = scmp.eq.s32.totalorder %s25, 1
      %p94 = por %p92, %p93
      %p96 = scmp.ne.s32.totalorder %s79, %s95
      %p97 = scmp.eq.s32.totalorder %s25, 0
      %p98 = por %p96, %p97
      %s99 = smul.u32 %s26, %s27
      %s100 = smul.u32 %s38, %s34
      %s101 = ssub.s32 %s99, %s100
      %p102 = scmp.eq.s32.totalorder %s101, 0
      %s104 = sadd.s32 %s103, 1
      %s105 = scalar_select %p102, %s103, %s104
      %p108 = pneg %p102
      %p109 = scmp.eq.s32.totalorder %s19, 1
      %p110 = por %p108, %p109
      %p111 = scmp.ne.s32.totalorder %s103, %s106
      %p112 = scmp.eq.s32.totalorder %s19, 0
      %p113 = por %p111, %p112
      %p114 = scmp.ne.s32.totalorder %s103, %s106
      %p115 = scmp.eq.s32.totalorder %s24, 1
      %p116 = por %p114, %p115
      %p117 = scmp.ne.s32.totalorder %s106, %s107
      %p118 = scmp.eq.s32.totalorder %s24, 0
      %p119 = por %p117, %p118
      %p120 = scmp.ne.s32.totalorder %s106, %s107
      %p121 = scmp.eq.s32.totalorder %s25, 1
      %p122 = por %p120, %p121
      %p124 = scmp.ne.s32.totalorder %s107, %s123
      %p125 = scmp.eq.s32.totalorder %s25, 0
      %p126 = por %p124, %p125
      %s127 = smul.u32 %s26, %s27
      %s128 = smul.u32 %s38, %s34
      %s129 = ssub.s32 %s127, %s128
      %p130 = scmp.eq.s32.totalorder %s129, 0
      %s132 = sadd.s32 %s131, 1
      %s133 = scalar_select %p130, %s131, %s132
      %p136 = pneg %p130
      %p137 = scmp.eq.s32.totalorder %s19, 1
      %p138 = por %p136, %p137
      %p139 = scmp.ne.s32.totalorder %s131, %s134
      %p140 = scmp.eq.s32.totalorder %s19, 0
      %p141 = por %p139, %p140
      %p142 = scmp.ne.s32.totalorder %s131, %s134
      %p143 = scmp.eq.s32.totalorder %s24, 1
      %p144 = por %p142, %p143
      %p145 = scmp.ne.s32.totalorder %s134, %s135
      %p146 = scmp.eq.s32.totalorder %s24, 0
      %p147 = por %p145, %p146
      %p148 = scmp.ne.s32.totalorder %s134, %s135
      %p149 = scmp.eq.s32.totalorder %s25, 1
      %p150 = por %p148, %p149
      %p152 = scmp.ne.s32.totalorder %s135, %s151
      %p153 = scmp.eq.s32.totalorder %s25, 0
      %p154 = por %p152, %p153
      %s156 = sadd.s32 %s155, 1
      %p159 = scmp.eq.s32.totalorder %s19, 1
      %p160 = scmp.ne.s32.totalorder %s155, %s157
      %p161 = scmp.eq.s32.totalorder %s19, 0
      %p162 = por %p160, %p161
      %p163 = scmp.ne.s32.totalorder %s155, %s157
      %p164 = scmp.eq.s32.totalorder %s24, 1
      %p165 = por %p163, %p164
      %p166 = scmp.ne.s32.totalorder %s157, %s158
      %p167 = scmp.eq.s32.totalorder %s24, 0
      %p168 = por %p166, %p167
      %p169 = scmp.ne.s32.totalorder %s157, %s158
      %p170 = scmp.eq.s32.totalorder %s25, 1
      %p171 = por %p169, %p170
      %p173 = scmp.ne.s32.totalorder %s158, %s172
      %p174 = scmp.eq.s32.totalorder %s25, 0
      %p175 = por %p173, %p174
      %s177 = sadd.s32 %s176, 1
      %p180 = scmp.eq.s32.totalorder %s19, 1
      %p181 = scmp.ne.s32.totalorder %s176, %s178
      %p182 = scmp.eq.s32.totalorder %s19, 0
      %p183 = por %p181, %p182
      %p184 = scmp.ne.s32.totalorder %s176, %s178
      %p185 = scmp.eq.s32.totalorder %s24, 1
      %p186 = por %p184, %p185
      %p187 = scmp.ne.s32.totalorder %s178, %s179
      %p188 = scmp.eq.s32.totalorder %s24, 0
      %p189 = por %p187, %p188
      %p190 = scmp.ne.s32.totalorder %s178, %s179
      %p191 = scmp.eq.s32.totalorder %s25, 1
      %p192 = por %p190, %p191
      %p194 = scmp.ne.s32.totalorder %s179, %s193
      %p195 = scmp.eq.s32.totalorder %s25, 0
      %p196 = por %p194, %p195
      %s198 = sadd.s32 %s197, 1
      %p201 = scmp.eq.s32.totalorder %s19, 1
      %p202 = scmp.ne.s32.totalorder %s197, %s199
      %p203 = scmp.eq.s32.totalorder %s19, 0
      %p204 = por %p202, %p203
      %p205 = scmp.ne.s32.totalorder %s197, %s199
      %p206 = scmp.eq.s32.totalorder %s24, 1
      %p207 = por %p205, %p206
      %p208 = scmp.ne.s32.totalorder %s199, %s200
      %p209 = scmp.eq.s32.totalorder %s24, 0
      %p210 = por %p208, %p209
      %p211 = scmp.ne.s32.totalorder %s199, %s200
      %p212 = scmp.eq.s32.totalorder %s25, 1
      %p213 = por %p211, %p212
      %p215 = scmp.ne.s32.totalorder %s200, %s214
      %p216 = scmp.eq.s32.totalorder %s25, 0
      %p217 = por %p215, %p216
      %s219 = sadd.s32 %s218, 1
      %p222 = scmp.eq.s32.totalorder %s19, 1
      %p223 = scmp.ne.s32.totalorder %s218, %s220
      %p224 = scmp.eq.s32.totalorder %s19, 0
      %p225 = por %p223, %p224
      %p226 = scmp.ne.s32.totalorder %s218, %s220
      %p227 = scmp.eq.s32.totalorder %s24, 1
      %p228 = por %p226, %p227
      %p229 = scmp.ne.s32.totalorder %s220, %s221
      %p230 = scmp.eq.s32.totalorder %s24, 0
      %p231 = por %p229, %p230
      %p232 = scmp.ne.s32.totalorder %s220, %s221
      %p233 = scmp.eq.s32.totalorder %s25, 1
      %p234 = por %p232, %p233
      %p236 = scmp.ne.s32.totalorder %s221, %s235
      %p237 = scmp.eq.s32.totalorder %s25, 0
      %p238 = por %p236, %p237
      %s240 = sadd.s32 %s239, 1
      %p243 = scmp.eq.s32.totalorder %s19, 1
      %p244 = scmp.ne.s32.totalorder %s239, %s241
      %p245 = scmp.eq.s32.totalorder %s19, 0
      %p246 = por %p244, %p245
      %p247 = scmp.ne.s32.totalorder %s239, %s241
      %p248 = scmp.eq.s32.totalorder %s24, 1
      %p249 = por %p247, %p248
      %p250 = scmp.ne.s32.totalorder %s241, %s242
      %p251 = scmp.eq.s32.totalorder %s24, 0
      %p252 = por %p250, %p251
      %p253 = scmp.ne.s32.totalorder %s241, %s242
      %p254 = scmp.eq.s32.totalorder %s25, 1
      %p255 = por %p253, %p254
      %p257 = scmp.ne.s32.totalorder %s242, %s256
      %p258 = scmp.eq.s32.totalorder %s25, 0
      %p259 = por %p257, %p258
      %s261 = sadd.s32 %s260, 1
      %p264 = scmp.eq.s32.totalorder %s19, 1
      %p265 = scmp.ne.s32.totalorder %s260, %s262
      %p266 = scmp.eq.s32.totalorder %s19, 0
      %p267 = por %p265, %p266
      %p268 = scmp.ne.s32.totalorder %s260, %s262
      %p269 = scmp.eq.s32.totalorder %s24, 1
      %p270 = por %p268, %p269
      %p271 = scmp.ne.s32.totalorder %s262, %s263
      %p272 = scmp.eq.s32.totalorder %s24, 0
      %p273 = por %p271, %p272
      %p274 = scmp.ne.s32.totalorder %s262, %s263
      %p275 = scmp.eq.s32.totalorder %s25, 1
      %p276 = por %p274, %p275
      %p278 = scmp.ne.s32.totalorder %s263, %s277
      %p279 = scmp.eq.s32.totalorder %s25, 0
      %p280 = por %p278, %p279
      %s282 = sadd.s32 %s281, 1
      %p285 = scmp.eq.s32.totalorder %s19, 1
      %p286 = scmp.ne.s32.totalorder %s281, %s283
      %p287 = scmp.eq.s32.totalorder %s19, 0
      %p288 = por %p286, %p287
      %p289 = scmp.ne.s32.totalorder %s281, %s283
      %p290 = scmp.eq.s32.totalorder %s24, 1
      %p291 = por %p289, %p290
      %p292 = scmp.ne.s32.totalorder %s283, %s284
      %p293 = scmp.eq.s32.totalorder %s24, 0
      %p294 = por %p292, %p293
      %p295 = scmp.ne.s32.totalorder %s283, %s284
      %p296 = scmp.eq.s32.totalorder %s25, 1
      %p297 = por %p295, %p296
      %p299 = scmp.ne.s32.totalorder %s284, %s298
      %p300 = scmp.eq.s32.totalorder %s25, 0
      %p301 = por %p299, %p300
      %p302 = scmp.le.s32.totalorder 1, %s19
      %p303 = scmp.lt.s32.totalorder %s19, 3
      %p304 = pnand %p302, %p303
      %p305 = pneg %p304
      // Predicated region
      $region9: #{tpu_custom_call.1} parent=5 // pred_check
        _
      $region10: #{tpu_custom_call.1} parent=5 // pred_check_branch
        %307 = sbr.rel (%p304) target = $region12
      $region11: #{tpu_custom_call.1} parent=5 // pred_region
        %s308 = ssub.s32 %s19, 1
        // Predicated region
        $region13: #{tpu_custom_call.1} parent=11 // pred_check
          %p309 = pneg %p168
        $region14: #{tpu_custom_call.1} parent=11 // pred_check_branch
          %311 = sbr.rel (%p309) target = $region16
        $region15: #{tpu_custom_call.1} parent=11 // pred_region
          _
        $region16: #{tpu_custom_call.1} parent=11 // pred_fallthru
          _
        // Predicated region
        $region17: #{tpu_custom_call.1} parent=11 // pred_check
          %p312 = pneg %p189
        $region18: #{tpu_custom_call.1} parent=11 // pred_check_branch
          %314 = sbr.rel (%p312) target = $region20
        $region19: #{tpu_custom_call.1} parent=11 // pred_region
          %s316 = ssub.s32 1024, 1024
          %317 = vsyncadd [#allocation6], %s316
          %s318 = sshll.u32 [#allocation5], 4
          %s319 = int_to_ptr.vmem [resolvable:$true] %s318
          %324 = dma.hbm_to_vmem [thread:$0]  %s5, 1024, %s319, [#allocation6], 64, 64, 4
        $region20: #{tpu_custom_call.1} parent=11 // pred_fallthru
          _
        // Predicated region
        $region21: #{tpu_custom_call.1} parent=11 // pred_check
          %p325 = pneg %p210
        $region22: #{tpu_custom_call.1} parent=11 // pred_check_branch
          %327 = sbr.rel (%p325) target = $region24
        $region23: #{tpu_custom_call.1} parent=11 // pred_region
          _
        $region24: #{tpu_custom_call.1} parent=11 // pred_fallthru
          _
        // Predicated region
        $region25: #{tpu_custom_call.1} parent=11 // pred_check
          %p328 = pneg %p231
        $region26: #{tpu_custom_call.1} parent=11 // pred_check_branch
          %330 = sbr.rel (%p328) target = $region28
        $region27: #{tpu_custom_call.1} parent=11 // pred_region
          %s332 = ssub.s32 1024, 1024
          %333 = vsyncadd [#allocation9], %s332
          %s334 = sshll.u32 [#allocation8], 4
          %s335 = int_to_ptr.vmem [resolvable:$true] %s334
          %340 = dma.hbm_to_vmem [thread:$0]  %s7, 1024, %s335, [#allocation9], 64, 64, 4
        $region28: #{tpu_custom_call.1} parent=11 // pred_fallthru
          _
        // Predicated region
        $region29: #{tpu_custom_call.1} parent=11 // pred_check
          %p341 = pneg %p252
        $region30: #{tpu_custom_call.1} parent=11 // pred_check_branch
          %343 = sbr.rel (%p341) target = $region32
        $region31: #{tpu_custom_call.1} parent=11 // pred_region
          _
        $region32: #{tpu_custom_call.1} parent=11 // pred_fallthru
          _
        // Predicated region
        $region33: #{tpu_custom_call.1} parent=11 // pred_check
          %p344 = pneg %p273
        $region34: #{tpu_custom_call.1} parent=11 // pred_check_branch
          %346 = sbr.rel (%p344) target = $region36
        $region35: #{tpu_custom_call.1} parent=11 // pred_region
          %s348 = ssub.s32 2048, 2048
          %349 = vsyncadd [#allocation9], %s348
          %s350 = sshll.u32 [#allocation10], 4
          %s351 = int_to_ptr.vmem [resolvable:$true] %s350
          %356 = dma.hbm_to_vmem [thread:$0]  %s9, 2048, %s351, [#allocation9], 128, 128, 8
        $region36: #{tpu_custom_call.1} parent=11 // pred_fallthru
          _
      $region12: #{tpu_custom_call.1} parent=5 // pred_fallthru
        _
      %p357 = scmp.lt.s32.totalorder %s19, 2
      // Predicated region
      $region37: #{tpu_custom_call.1} parent=5 // pred_check
        %p358 = pneg %p357
      $region38: #{tpu_custom_call.1} parent=5 // pred_check_branch
        %360 = sbr.rel (%p358) target = $region40
      $region39: #{tpu_custom_call.1} parent=5 // pred_region
        // Predicated region
        $region41: #{tpu_custom_call.1} parent=39 // pred_check
          %p361 = pneg %p55
        $region42: #{tpu_custom_call.1} parent=39 // pred_check_branch
          %363 = sbr.rel (%p361) target = $region44
        $region43: #{tpu_custom_call.1} parent=39 // pred_region
          %s364 = ssub.s32 1, %s26
          %s365 = smul.u32 %s364, %s27
          %s366 = smul.u32 2, %s365
          %p367 = scmp.lt.s32.totalorder %s366, 1
          %s368 = scalar_select %p367, %s366, 1
          %s369 = smul.addr %s368, 4
          %s370 = scalar_lea.vmem %s0, %s369
          %s371 = ssub.s32 1, %s26
          %s372 = smul.u32 %s371, %s27
          %s373 = smul.u32 2, %s372
        $region44: #{tpu_custom_call.1} parent=39 // pred_fallthru
          _
        // Predicated region
        $region45: #{tpu_custom_call.1} parent=39 // pred_check
          %p374 = pneg %p85
        $region46: #{tpu_custom_call.1} parent=39 // pred_check_branch
          %376 = sbr.rel (%p374) target = $region48
        $region47: #{tpu_custom_call.1} parent=39 // pred_region
          %s377 = ssub.s32 1, %s26
          %s378 = smul.u32 %s377, %s27
          %s379 = smul.u32 32, %s378
          %p380 = scmp.lt.s32.totalorder %s379, 31
          %s381 = scalar_select %p380, %s379, 31
          %s382 = smul.addr %s381, 4
          %s383 = scalar_lea.vmem %s1, %s382
          %s384 = ssub.s32 1, %s26
          %s385 = smul.u32 %s384, %s27
          %s386 = smul.u32 32, %s385
        $region48: #{tpu_custom_call.1} parent=39 // pred_fallthru
          _
        // Predicated region
        $region49: #{tpu_custom_call.1} parent=39 // pred_check
          %p387 = pneg %p113
        $region50: #{tpu_custom_call.1} parent=39 // pred_check_branch
          %389 = sbr.rel (%p387) target = $region52
        $region51: #{tpu_custom_call.1} parent=39 // pred_region
          %s390 = smul.u32 %s26, %s27
          %s391 = smul.u32 32, %s390
          %p392 = scmp.lt.s32.totalorder %s391, 31
          %s393 = scalar_select %p392, %s391, 31
          %s394 = smul.addr %s393, 4
          %s395 = scalar_lea.vmem %s2, %s394
          %s396 = smul.u32 %s26, %s27
          %s397 = smul.u32 32, %s396
        $region52: #{tpu_custom_call.1} parent=39 // pred_fallthru
          _
        // Predicated region
        $region53: #{tpu_custom_call.1} parent=39 // pred_check
          %p398 = pneg %p141
        $region54: #{tpu_custom_call.1} parent=39 // pred_check_branch
          %400 = sbr.rel (%p398) target = $region56
        $region55: #{tpu_custom_call.1} parent=39 // pred_region
          %s401 = smul.u32 %s26, %s27
          %s402 = smul.u32 32, %s401
          %p403 = scmp.lt.s32.totalorder %s402, 31
          %s404 = scalar_select %p403, %s402, 31
          %s405 = smul.addr %s404, 8
          %s406 = scalar_lea.vmem %s3, %s405
          %s407 = smul.u32 %s26, %s27
          %s408 = smul.u32 32, %s407
        $region56: #{tpu_custom_call.1} parent=39 // pred_fallthru
          _
      $region40: #{tpu_custom_call.1} parent=5 // pred_fallthru
        _
      %p409 = scmp.le.s32.totalorder 1, %s19
      %p410 = scmp.lt.s32.totalorder %s19, 3
      %p411 = pnand %p409, %p410
      %p412 = pneg %p411
      // Predicated region
      $region57: #{tpu_custom_call.1} parent=5 // pred_check
        _
      $region58: #{tpu_custom_call.1} parent=5 // pred_check_branch
        %414 = sbr.rel (%p411) target = $region60
      $region59: #{tpu_custom_call.1} parent=5 // pred_region
        %s415 = ssub.s32 %s19, 1
        // Predicated region
        $region61: #{tpu_custom_call.1} parent=59 // pred_check
          %p416 = pneg %p189
        $region62: #{tpu_custom_call.1} parent=59 // pred_check_branch
          %418 = sbr.rel (%p416) target = $region64
        $region63: #{tpu_custom_call.1} parent=59 // pred_region
          %419 = dma.done [#allocation6], 1024
        $region64: #{tpu_custom_call.1} parent=59 // pred_fallthru
          _
        // Predicated region
        $region65: #{tpu_custom_call.1} parent=59 // pred_check
          %p420 = pneg %p231
        $region66: #{tpu_custom_call.1} parent=59 // pred_check_branch
          %422 = sbr.rel (%p420) target = $region68
        $region67: #{tpu_custom_call.1} parent=59 // pred_region
          %423 = dma.done [#allocation9], 1024
        $region68: #{tpu_custom_call.1} parent=59 // pred_fallthru
          _
        // Predicated region
        $region69: #{tpu_custom_call.1} parent=59 // pred_check
          %p424 = pneg %p273
        $region70: #{tpu_custom_call.1} parent=59 // pred_check_branch
          %426 = sbr.rel (%p424) target = $region72
        $region71: #{tpu_custom_call.1} parent=59 // pred_region
          %427 = dma.done [#allocation9], 2048
        $region72: #{tpu_custom_call.1} parent=59 // pred_fallthru
          _
        %s428 = ssub.s32 1, %s28
        %s429 = smul.u32 %s428, %s29
        %s430 = smul.u32 2, %s429
        %p431 = scmp.lt.s32.totalorder %s430, 1
        %s432 = scalar_select %p431, %s430, 1
        %s433 = smul.addr %s432, 4
        %s434 = scalar_lea.vmem %s0, %s433
        %p435 = pneg %p61
        %p436 = pneg %p58
        %s437 = ssub.s32 1, %s28
        %s438 = smul.u32 %s437, %s29
        %s439 = smul.u32 32, %s438
        %p440 = scmp.lt.s32.totalorder %s439, 31
        %s441 = scalar_select %p440, %s439, 31
        %s442 = smul.addr %s441, 4
        %s443 = scalar_lea.vmem %s1, %s442
        %p444 = pneg %p91
        %p445 = pneg %p88
        %s446 = smul.u32 %s28, %s29
        %s447 = smul.u32 32, %s446
        %p448 = scmp.lt.s32.totalorder %s447, 31
        %s449 = scalar_select %p448, %s447, 31
        %s450 = smul.addr %s449, 4
        %s451 = scalar_lea.vmem %s2, %s450
        %p452 = pneg %p119
        %p453 = pneg %p116
        %s454 = smul.u32 %s28, %s29
        %s455 = smul.u32 32, %s454
        %p456 = scmp.lt.s32.totalorder %s455, 31
        %s457 = scalar_select %p456, %s455, 31
        %s458 = smul.addr %s457, 8
        %s459 = scalar_lea.vmem %s3, %s458
        %p460 = pneg %p147
        %p461 = pneg %p144
        %p462 = pneg %p168
        %p463 = pneg %p165
        %p464 = pneg %p189
        %p465 = pneg %p186
        %p466 = pneg %p210
        %p467 = pneg %p207
        %p468 = pneg %p231
        %p469 = pneg %p228
        %p470 = pneg %p252
        %p471 = pneg %p249
        %p472 = pneg %p273
        %p473 = pneg %p270
        %p474 = pneg %p294
        %p475 = pneg %p291
        %s476 = ssub.s32 1, %s28
        %s477 = smul.u32 %s476, %s29
        %s478 = smul.u32 2, %s477
        %p479 = scmp.lt.s32.totalorder %s478, 1
        %s480 = scalar_select %p479, %s478, 1
        %s481 = smul.addr %s480, 4
        %s482 = scalar_lea.vmem %s0, %s481
        %s483 = ssub.s32 1, %s28
        %s484 = smul.u32 %s483, %s29
        %s485 = smul.u32 2, %s484
        %s486 = ssub.s32 1, %s28
        %s487 = smul.u32 %s486, %s29
        %s488 = smul.u32 32, %s487
        %p489 = scmp.lt.s32.totalorder %s488, 31
        %s490 = scalar_select %p489, %s488, 31
        %s491 = smul.addr %s490, 4
        %s492 = scalar_lea.vmem %s1, %s491
        %s493 = ssub.s32 1, %s28
        %s494 = smul.u32 %s493, %s29
        %s495 = smul.u32 32, %s494
        %s496 = smul.u32 %s28, %s29
        %s497 = smul.u32 32, %s496
        %p498 = scmp.lt.s32.totalorder %s497, 31
        %s499 = scalar_select %p498, %s497, 31
        %s500 = smul.addr %s499, 4
        %s501 = scalar_lea.vmem %s2, %s500
        %s502 = smul.u32 %s28, %s29
        %s503 = smul.u32 32, %s502
        %s504 = smul.u32 %s28, %s29
        %s505 = smul.u32 32, %s504
        %p506 = scmp.lt.s32.totalorder %s505, 31
        %s507 = scalar_select %p506, %s505, 31
        %s508 = smul.addr %s507, 8
        %s509 = scalar_lea.vmem %s3, %s508
        %s510 = smul.u32 %s28, %s29
        %s511 = smul.u32 32, %s510
        %p513 = scmp.eq.s32.totalorder %s28, 0
        %p514 = scmp.eq.s32.totalorder %s29, 0
        %p515 = pnand %p513, %p514
        %p516 = pneg %p515
        // Predicated region
        $region73: #{tpu_custom_call.1} parent=59 // pred_check
          _
        $region74: #{tpu_custom_call.1} parent=59 // pred_check_branch
          %518 = sbr.rel (%p515) target = $region76
        $region75: #{tpu_custom_call.1} parent=59 // pred_region
          %519 = vst [vmem:[#allocation2] sm:$0xff] 0.0
          %520 = vst [vmem:[#allocation2 + $0x8] sm:$0xff] 0.0
          %521 = vst [vmem:[#allocation2 + $0x10] sm:$0xff] 0.0
          %522 = vst [vmem:[#allocation2 + $0x18] sm:$0xff] 0.0
          %523 = vst [vmem:[#allocation2 + $0x20] sm:$0xff] 0.0
          %524 = vst [vmem:[#allocation2 + $0x28] sm:$0xff] 0.0
          %525 = vst [vmem:[#allocation2 + $0x30] sm:$0xff] 0.0
          %526 = vst [vmem:[#allocation2 + $0x38] sm:$0xff] 0.0
          %527 = vst [vmem:[#allocation2 + $0x40] sm:$0xff] 0.0
          %528 = vst [vmem:[#allocation2 + $0x48] sm:$0xff] 0.0
          %529 = vst [vmem:[#allocation2 + $0x50] sm:$0xff] 0.0
          %530 = vst [vmem:[#allocation2 + $0x58] sm:$0xff] 0.0
          %531 = vst [vmem:[#allocation2 + $0x60] sm:$0xff] 0.0
          %532 = vst [vmem:[#allocation2 + $0x68] sm:$0xff] 0.0
          %533 = vst [vmem:[#allocation2 + $0x70] sm:$0xff] 0.0
          %534 = vst [vmem:[#allocation2 + $0x78] sm:$0xff] 0.0
        $region76: #{tpu_custom_call.1} parent=59 // pred_fallthru
          _
        // Predicated region
        $region77: #{tpu_custom_call.1} parent=59 // pred_check
          %p535 = pneg %p513
        $region78: #{tpu_custom_call.1} parent=59 // pred_check_branch
          %537 = sbr.rel (%p535) target = $region80
        $region79: #{tpu_custom_call.1} parent=59 // pred_region
          %v538 = vld [vmem:[#allocation2] sm:$0xff]
          %v539 = vld [vmem:[#allocation2 + $0x8] sm:$0xff]
          %v540 = vld [vmem:[#allocation2 + $0x10] sm:$0xff]
          %v541 = vld [vmem:[#allocation2 + $0x18] sm:$0xff]
          %v542 = vld [vmem:[#allocation2 + $0x20] sm:$0xff]
          %v543 = vld [vmem:[#allocation2 + $0x28] sm:$0xff]
          %v544 = vld [vmem:[#allocation2 + $0x30] sm:$0xff]
          %v545 = vld [vmem:[#allocation2 + $0x38] sm:$0xff]
          %v546 = vld [vmem:[#allocation2 + $0x40] sm:$0xff]
          %v547 = vld [vmem:[#allocation2 + $0x48] sm:$0xff]
          %v548 = vld [vmem:[#allocation2 + $0x50] sm:$0xff]
          %v549 = vld [vmem:[#allocation2 + $0x58] sm:$0xff]
          %v550 = vld [vmem:[#allocation2 + $0x60] sm:$0xff]
          %v551 = vld [vmem:[#allocation2 + $0x68] sm:$0xff]
          %v552 = vld [vmem:[#allocation2 + $0x70] sm:$0xff]
          %v553 = vld [vmem:[#allocation2 + $0x78] sm:$0xff]
          %v554 = vld [vmem:[%s482] sm:$0xff]
          %v555 = vld [vmem:[%s482 + $0x8] sm:$0xff]
          %v556 = vld [vmem:[%s482 + $0x10] sm:$0xff]
          %v557 = vld [vmem:[%s482 + $0x18] sm:$0xff]
          %v558 = vld [vmem:[%s482 + $0x20] sm:$0xff]
          %v559 = vld [vmem:[%s482 + $0x28] sm:$0xff]
          %v560 = vld [vmem:[%s482 + $0x30] sm:$0xff]
          %v561 = vld [vmem:[%s482 + $0x38] sm:$0xff]
          %v562 = vld [vmem:[%s482 + $0x40] sm:$0xff]
          %v563 = vld [vmem:[%s482 + $0x48] sm:$0xff]
          %v564 = vld [vmem:[%s482 + $0x50] sm:$0xff]
          %v565 = vld [vmem:[%s482 + $0x58] sm:$0xff]
          %v566 = vld [vmem:[%s482 + $0x60] sm:$0xff]
          %v567 = vld [vmem:[%s482 + $0x68] sm:$0xff]
          %v568 = vld [vmem:[%s482 + $0x70] sm:$0xff]
          %v569 = vld [vmem:[%s482 + $0x78] sm:$0xff]
          %v570 = vld [vmem:[%s492] sm:$0xf]
          %v571 = vld [vmem:[%s492 + $0x4] sm:$0xf]
          %v572 = vld [vmem:[%s492 + $0x8] sm:$0xf]
          %v573 = vld [vmem:[%s492 + $0xc] sm:$0xf]
          %v574 = vld [vmem:[%s492 + $0x10] sm:$0xf]
          %v575 = vld [vmem:[%s492 + $0x14] sm:$0xf]
          %v576 = vld [vmem:[%s492 + $0x18] sm:$0xf]
          %v577 = vld [vmem:[%s492 + $0x1c] sm:$0xf]
          %v578 = vld [vmem:[%s492 + $0x20] sm:$0xf]
          %v579 = vld [vmem:[%s492 + $0x24] sm:$0xf]
          %v580 = vld [vmem:[%s492 + $0x28] sm:$0xf]
          %v581 = vld [vmem:[%s492 + $0x2c] sm:$0xf]
          %v582 = vld [vmem:[%s492 + $0x30] sm:$0xf]
          %v583 = vld [vmem:[%s492 + $0x34] sm:$0xf]
          %v584 = vld [vmem:[%s492 + $0x38] sm:$0xf]
          %v585 = vld [vmem:[%s492 + $0x3c] sm:$0xf]
          %v586 = vld [vmem:[%s492 + $0x40] sm:$0xf]
          %v587 = vld [vmem:[%s492 + $0x44] sm:$0xf]
          %v588 = vld [vmem:[%s492 + $0x48] sm:$0xf]
          %v589 = vld [vmem:[%s492 + $0x4c] sm:$0xf]
          %v590 = vld [vmem:[%s492 + $0x50] sm:$0xf]
          %v591 = vld [vmem:[%s492 + $0x54] sm:$0xf]
          %v592 = vld [vmem:[%s492 + $0x58] sm:$0xf]
          %v593 = vld [vmem:[%s492 + $0x5c] sm:$0xf]
          %v594 = vld [vmem:[%s492 + $0x60] sm:$0xf]
          %v595 = vld [vmem:[%s492 + $0x64] sm:$0xf]
          %v596 = vld [vmem:[%s492 + $0x68] sm:$0xf]
          %v597 = vld [vmem:[%s492 + $0x6c] sm:$0xf]
          %v598 = vld [vmem:[%s492 + $0x70] sm:$0xf]
          %v599 = vld [vmem:[%s492 + $0x74] sm:$0xf]
          %v600 = vld [vmem:[%s492 + $0x78] sm:$0xf]
          %v601 = vld [vmem:[%s492 + $0x7c] sm:$0xf]
          %v618 = vunpack.c.l.b16 %v554
          %v619 = vunpack.c.h.b16 %v554
          %v620 = vunpack.c.l.b16 %v555
          %v621 = vunpack.c.h.b16 %v555
          %v622 = vunpack.c.l.b16 %v556
          %v623 = vunpack.c.h.b16 %v556
          %v624 = vunpack.c.l.b16 %v557
          %v625 = vunpack.c.h.b16 %v557
          %v626 = vunpack.c.l.b16 %v558
          %v627 = vunpack.c.h.b16 %v558
          %v628 = vunpack.c.l.b16 %v559
          %v629 = vunpack.c.h.b16 %v559
          %v630 = vunpack.c.l.b16 %v560
          %v631 = vunpack.c.h.b16 %v560
          %v632 = vunpack.c.l.b16 %v561
          %v633 = vunpack.c.h.b16 %v561
          %v634 = vunpack.c.l.b16 %v562
          %v635 = vunpack.c.h.b16 %v562
          %v636 = vunpack.c.l.b16 %v563
          %v637 = vunpack.c.h.b16 %v563
          %v638 = vunpack.c.l.b16 %v564
          %v639 = vunpack.c.h.b16 %v564
          %v640 = vunpack.c.l.b16 %v565
          %v641 = vunpack.c.h.b16 %v565
          %v642 = vunpack.c.l.b16 %v566
          %v643 = vunpack.c.h.b16 %v566
          %v644 = vunpack.c.l.b16 %v567
          %v645 = vunpack.c.h.b16 %v567
          %v646 = vunpack.c.l.b16 %v568
          %v647 = vunpack.c.h.b16 %v568
          %v648 = vunpack.c.l.b16 %v569
          %v649 = vunpack.c.h.b16 %v569
          %v650 = vpack.c.b16 %v620, %v618
          %v651 = vpack.c.b16 %v621, %v619
          %v652 = vpack.c.b16 %v624, %v622
          %v653 = vpack.c.b16 %v625, %v623
          %v654 = vpack.c.b16 %v628, %v626
          %v655 = vpack.c.b16 %v629, %v627
          %v656 = vpack.c.b16 %v632, %v630
          %v657 = vpack.c.b16 %v633, %v631
          %v658 = vpack.c.b16 %v636, %v634
          %v659 = vpack.c.b16 %v637, %v635
          %v660 = vpack.c.b16 %v640, %v638
          %v661 = vpack.c.b16 %v641, %v639
          %v662 = vpack.c.b16 %v644, %v642
          %v663 = vpack.c.b16 %v645, %v643
          %v664 = vpack.c.b16 %v648, %v646
          %v665 = vpack.c.b16 %v649, %v647
          %v714 = vunpack.c.l.b16 %v570
          %v715 = vunpack.c.l.b16 %v571
          %v716 = vunpack.c.l.b16 %v572
          %v717 = vunpack.c.l.b16 %v573
          %v718 = vunpack.c.l.b16 %v574
          %v719 = vunpack.c.l.b16 %v575
          %v720 = vunpack.c.l.b16 %v576
          %v721 = vunpack.c.l.b16 %v577
          %v722 = vunpack.c.l.b16 %v578
          %v723 = vunpack.c.l.b16 %v579
          %v724 = vunpack.c.l.b16 %v580
          %v725 = vunpack.c.l.b16 %v581
          %v726 = vunpack.c.l.b16 %v582
          %v727 = vunpack.c.l.b16 %v583
          %v728 = vunpack.c.l.b16 %v584
          %v729 = vunpack.c.l.b16 %v585
          %v730 = vunpack.c.l.b16 %v586
          %v731 = vunpack.c.l.b16 %v587
          %v732 = vunpack.c.l.b16 %v588
          %v733 = vunpack.c.l.b16 %v589
          %v734 = vunpack.c.l.b16 %v590
          %v735 = vunpack.c.l.b16 %v591
          %v736 = vunpack.c.l.b16 %v592
          %v737 = vunpack.c.l.b16 %v593
          %v738 = vunpack.c.l.b16 %v594
          %v739 = vunpack.c.l.b16 %v595
          %v740 = vunpack.c.l.b16 %v596
          %v741 = vunpack.c.l.b16 %v597
          %v742 = vunpack.c.l.b16 %v598
          %v743 = vunpack.c.l.b16 %v599
          %v744 = vunpack.c.l.b16 %v600
          %v745 = vunpack.c.l.b16 %v601
          %v746 = vpack.c.b16 %v715, %v714
          %v747 = vpack.c.b16 %v717, %v716
          %v748 = vpack.c.b16 %v719, %v718
          %v749 = vpack.c.b16 %v721, %v720
          %v750 = vpack.c.b16 %v723, %v722
          %v751 = vpack.c.b16 %v725, %v724
          %v752 = vpack.c.b16 %v727, %v726
          %v753 = vpack.c.b16 %v729, %v728
          %v754 = vpack.c.b16 %v731, %v730
          %v755 = vpack.c.b16 %v733, %v732
          %v756 = vpack.c.b16 %v735, %v734
          %v757 = vpack.c.b16 %v737, %v736
          %v758 = vpack.c.b16 %v739, %v738
          %v759 = vpack.c.b16 %v741, %v740
          %v760 = vpack.c.b16 %v743, %v742
          %v761 = vpack.c.b16 %v745, %v744
          %778 = vmatprep.subr.bf16.mxu0 0
          %779 = vmatpush1.bf16.msra.mxu0 %v753
          %780 = vmatprep.subr.bf16.mxu0 0
          %781 = vmatpush1.bf16.msra.mxu0 %v752
          %782 = vmatprep.subr.bf16.mxu0 0
          %783 = vmatpush1.bf16.msra.mxu0 %v751
          %784 = vmatprep.subr.bf16.mxu0 0
          %785 = vmatpush1.bf16.msra.mxu0 %v750
          %786 = vmatprep.subr.bf16.mxu0 0
          %787 = vmatpush1.bf16.msra.mxu0 %v749
          %788 = vmatprep.subr.bf16.mxu0 0
          %789 = vmatpush1.bf16.msra.mxu0 %v748
          %790 = vmatprep.subr.bf16.mxu0 0
          %791 = vmatpush1.bf16.msra.mxu0 %v747
          %792 = vmatprep.subr.bf16.mxu0 0
          %793 = vmatpush1.bf16.msra.mxu0 %v746
          %794 = vmatprep.subr.bf16.mxu0 0
          %795 = vmatpush2.bf16.msra.mxu0 %v761
          %796 = vmatprep.subr.bf16.mxu0 0
          %797 = vmatpush2.bf16.msra.mxu0 %v760
          %798 = vmatprep.subr.bf16.mxu0 0
          %799 = vmatpush2.bf16.msra.mxu0 %v759
          %800 = vmatprep.subr.bf16.mxu0 0
          %801 = vmatpush2.bf16.msra.mxu0 %v758
          %802 = vmatprep.subr.bf16.mxu0 0
          %803 = vmatpush2.bf16.msra.mxu0 %v757
          %804 = vmatprep.subr.bf16.mxu0 0
          %805 = vmatpush2.bf16.msra.mxu0 %v756
          %806 = vmatprep.subr.bf16.mxu0 0
          %807 = vmatpush2.bf16.msra.mxu0 %v755
          %808 = vmatprep.subr.bf16.mxu0 0
          %809 = vmatpush2.bf16.msra.mxu0 %v754
          %810 = vmatprep.mubr.bf16.mxu0 %v651
          %811 = vmatmul.mubr.bf16.gmra.mxu0 %v650
          %v812 = vpop.f32.mrf.mxu0
          %v813 = vadd.f32 0.0, %v812
          %v814 = vpop.f32.mrf.mxu0
          %v815 = vpop.f32.mrf.mxu0
          %v816 = vadd.f32 0.0, %v815
          %v817 = vpop.f32.mrf.mxu0
          %818 = vmatprep.mubr.bf16.mxu0 %v653
          %819 = vmatmul.mubr.bf16.gmra.mxu0 %v652
          %v820 = vpop.f32.mrf.mxu0
          %v821 = vadd.f32 0.0, %v820
          %v822 = vpop.f32.mrf.mxu0
          %v823 = vpop.f32.mrf.mxu0
          %v824 = vadd.f32 0.0, %v823
          %v825 = vpop.f32.mrf.mxu0
          %826 = vmatprep.mubr.bf16.mxu0 %v655
          %827 = vmatmul.mubr.bf16.gmra.mxu0 %v654
          %v828 = vpop.f32.mrf.mxu0
          %v829 = vadd.f32 0.0, %v828
          %v830 = vpop.f32.mrf.mxu0
          %v831 = vpop.f32.mrf.mxu0
          %v832 = vadd.f32 0.0, %v831
          %v833 = vpop.f32.mrf.mxu0
          %834 = vmatprep.mubr.bf16.mxu0 %v657
          %835 = vmatmul.mubr.bf16.gmra.mxu0 %v656
          %v836 = vpop.f32.mrf.mxu0
          %v837 = vadd.f32 0.0, %v836
          %v838 = vpop.f32.mrf.mxu0
          %v839 = vpop.f32.mrf.mxu0
          %v840 = vadd.f32 0.0, %v839
          %v841 = vpop.f32.mrf.mxu0
          %842 = vmatprep.mubr.bf16.mxu0 %v659
          %843 = vmatmul.mubr.bf16.gmra.mxu0 %v658
          %v844 = vpop.f32.mrf.mxu0
          %v845 = vadd.f32 0.0, %v844
          %v846 = vpop.f32.mrf.mxu0
          %v847 = vpop.f32.mrf.mxu0
          %v848 = vadd.f32 0.0, %v847
          %v849 = vpop.f32.mrf.mxu0
          %850 = vmatprep.mubr.bf16.mxu0 %v661
          %851 = vmatmul.mubr.bf16.gmra.mxu0 %v660
          %v852 = vpop.f32.mrf.mxu0
          %v853 = vadd.f32 0.0, %v852
          %v854 = vpop.f32.mrf.mxu0
          %v855 = vpop.f32.mrf.mxu0
          %v856 = vadd.f32 0.0, %v855
          %v857 = vpop.f32.mrf.mxu0
          %858 = vmatprep.mubr.bf16.mxu0 %v663
          %859 = vmatmul.mubr.bf16.gmra.mxu0 %v662
          %v860 = vpop.f32.mrf.mxu0
          %v861 = vadd.f32 0.0, %v860
          %v862 = vpop.f32.mrf.mxu0
          %v863 = vpop.f32.mrf.mxu0
          %v864 = vadd.f32 0.0, %v863
          %v865 = vpop.f32.mrf.mxu0
          %866 = vmatprep.mubr.bf16.mxu0 %v665
          %867 = vmatmul.mubr.bf16.gmra.mxu0 %v664
          %v868 = vpop.f32.mrf.mxu0
          %v869 = vadd.f32 0.0, %v868
          %v870 = vpop.f32.mrf.mxu0
          %v871 = vpop.f32.mrf.mxu0
          %v872 = vadd.f32 0.0, %v871
          %v873 = vpop.f32.mrf.mxu0
          %874 = vdwg.mxu0
          %v875 = vadd.f32 %v538, %v813
          %v876 = vadd.f32 %v539, %v816
          %v877 = vadd.f32 %v540, %v821
          %v878 = vadd.f32 %v541, %v824
          %v879 = vadd.f32 %v542, %v829
          %v880 = vadd.f32 %v543, %v832
          %v881 = vadd.f32 %v544, %v837
          %v882 = vadd.f32 %v545, %v840
          %v883 = vadd.f32 %v546, %v845
          %v884 = vadd.f32 %v547, %v848
          %v885 = vadd.f32 %v548, %v853
          %v886 = vadd.f32 %v549, %v856
          %v887 = vadd.f32 %v550, %v861
          %v888 = vadd.f32 %v551, %v864
          %v889 = vadd.f32 %v552, %v869
          %v890 = vadd.f32 %v553, %v872
          %891 = vst [vmem:[#allocation2] sm:$0xff] %v875
          %892 = vst [vmem:[#allocation2 + $0x8] sm:$0xff] %v876
          %893 = vst [vmem:[#allocation2 + $0x10] sm:$0xff] %v877
          %894 = vst [vmem:[#allocation2 + $0x18] sm:$0xff] %v878
          %895 = vst [vmem:[#allocation2 + $0x20] sm:$0xff] %v879
          %896 = vst [vmem:[#allocation2 + $0x28] sm:$0xff] %v880
          %897 = vst [vmem:[#allocation2 + $0x30] sm:$0xff] %v881
          %898 = vst [vmem:[#allocation2 + $0x38] sm:$0xff] %v882
          %899 = vst [vmem:[#allocation2 + $0x40] sm:$0xff] %v883
          %900 = vst [vmem:[#allocation2 + $0x48] sm:$0xff] %v884
          %901 = vst [vmem:[#allocation2 + $0x50] sm:$0xff] %v885
          %902 = vst [vmem:[#allocation2 + $0x58] sm:$0xff] %v886
          %903 = vst [vmem:[#allocation2 + $0x60] sm:$0xff] %v887
          %904 = vst [vmem:[#allocation2 + $0x68] sm:$0xff] %v888
          %905 = vst [vmem:[#allocation2 + $0x70] sm:$0xff] %v889
          %906 = vst [vmem:[#allocation2 + $0x78] sm:$0xff] %v890
        $region80: #{tpu_custom_call.1} parent=59 // pred_fallthru
          _
        %p907 = scmp.eq.s32.totalorder %s28, 1
        %p908 = pnand %p907, %p514
        %p909 = pneg %p908
        // Predicated region
        $region81: #{tpu_custom_call.1} parent=59 // pred_check
          _
        $region82: #{tpu_custom_call.1} parent=59 // pred_check_branch
          %911 = sbr.rel (%p908) target = $region84
        $region83: #{tpu_custom_call.1} parent=59 // pred_region
          %v912 = vld [vmem:[#allocation2] sm:$0xff]
          %v913 = vld [vmem:[#allocation2 + $0x8] sm:$0xff]
          %v914 = vld [vmem:[#allocation2 + $0x10] sm:$0xff]
          %v915 = vld [vmem:[#allocation2 + $0x18] sm:$0xff]
          %v916 = vld [vmem:[#allocation2 + $0x20] sm:$0xff]
          %v917 = vld [vmem:[#allocation2 + $0x28] sm:$0xff]
          %v918 = vld [vmem:[#allocation2 + $0x30] sm:$0xff]
          %v919 = vld [vmem:[#allocation2 + $0x38] sm:$0xff]
          %v920 = vld [vmem:[#allocation2 + $0x40] sm:$0xff]
          %v921 = vld [vmem:[#allocation2 + $0x48] sm:$0xff]
          %v922 = vld [vmem:[#allocation2 + $0x50] sm:$0xff]
          %v923 = vld [vmem:[#allocation2 + $0x58] sm:$0xff]
          %v924 = vld [vmem:[#allocation2 + $0x60] sm:$0xff]
          %v925 = vld [vmem:[#allocation2 + $0x68] sm:$0xff]
          %v926 = vld [vmem:[#allocation2 + $0x70] sm:$0xff]
          %v927 = vld [vmem:[#allocation2 + $0x78] sm:$0xff]
          %v928 = vpack.c.bf16 %v913, %v912
          %v929 = vpack.c.bf16 %v915, %v914
          %v930 = vpack.c.bf16 %v917, %v916
          %v931 = vpack.c.bf16 %v919, %v918
          %v932 = vpack.c.bf16 %v921, %v920
          %v933 = vpack.c.bf16 %v923, %v922
          %v934 = vpack.c.bf16 %v925, %v924
          %v935 = vpack.c.bf16 %v927, %v926
          %v936 = vld [vmem:[#allocation5] sm:$0xf]
          %v937 = vld [vmem:[#allocation5 + $0x4] sm:$0xf]
          %v938 = vld [vmem:[#allocation5 + $0x8] sm:$0xf]
          %v939 = vld [vmem:[#allocation5 + $0xc] sm:$0xf]
          %v940 = vld [vmem:[#allocation5 + $0x10] sm:$0xf]
          %v941 = vld [vmem:[#allocation5 + $0x14] sm:$0xf]
          %v942 = vld [vmem:[#allocation5 + $0x18] sm:$0xf]
          %v943 = vld [vmem:[#allocation5 + $0x1c] sm:$0xf]
          %v944 = vld [vmem:[#allocation5 + $0x20] sm:$0xf]
          %v945 = vld [vmem:[#allocation5 + $0x24] sm:$0xf]
          %v946 = vld [vmem:[#allocation5 + $0x28] sm:$0xf]
          %v947 = vld [vmem:[#allocation5 + $0x2c] sm:$0xf]
          %v948 = vld [vmem:[#allocation5 + $0x30] sm:$0xf]
          %v949 = vld [vmem:[#allocation5 + $0x34] sm:$0xf]
          %v950 = vld [vmem:[#allocation5 + $0x38] sm:$0xf]
          %v951 = vld [vmem:[#allocation5 + $0x3c] sm:$0xf]
          %v968 = vunpack.c.l.b16 %v936
          %v969 = vunpack.c.l.b16 %v937
          %v970 = vunpack.c.l.b16 %v938
          %v971 = vunpack.c.l.b16 %v939
          %v972 = vunpack.c.l.b16 %v940
          %v973 = vunpack.c.l.b16 %v941
          %v974 = vunpack.c.l.b16 %v942
          %v975 = vunpack.c.l.b16 %v943
          %v976 = vunpack.c.l.b16 %v944
          %v977 = vunpack.c.l.b16 %v945
          %v978 = vunpack.c.l.b16 %v946
          %v979 = vunpack.c.l.b16 %v947
          %v980 = vunpack.c.l.b16 %v948
          %v981 = vunpack.c.l.b16 %v949
          %v982 = vunpack.c.l.b16 %v950
          %v983 = vunpack.c.l.b16 %v951
          %v984 = vpack.c.b16 %v969, %v968
          %v985 = vpack.c.b16 %v971, %v970
          %v986 = vpack.c.b16 %v973, %v972
          %v987 = vpack.c.b16 %v975, %v974
          %v988 = vpack.c.b16 %v977, %v976
          %v989 = vpack.c.b16 %v979, %v978
          %v990 = vpack.c.b16 %v981, %v980
          %v991 = vpack.c.b16 %v983, %v982
          %1000 = vmatprep.subr.bf16.mxu0 0
          %1001 = vmatpush1.bf16.xpose.msra.mxu0 %v991
          %1002 = vmatprep.subr.bf16.mxu0 0
          %1003 = vmatpush1.bf16.xpose.msra.mxu0 %v990
          %1004 = vmatprep.subr.bf16.mxu0 0
          %1005 = vmatpush1.bf16.xpose.msra.mxu0 %v989
          %1006 = vmatprep.subr.bf16.mxu0 0
          %1007 = vmatpush1.bf16.xpose.msra.mxu0 %v988
          %1008 = vmatprep.subr.bf16.mxu0 0
          %1009 = vmatpush1.bf16.xpose.msra.mxu0 %v987
          %1010 = vmatprep.subr.bf16.mxu0 0
          %1011 = vmatpush1.bf16.xpose.msra.mxu0 %v986
          %1012 = vmatprep.subr.bf16.mxu0 0
          %1013 = vmatpush1.bf16.xpose.msra.mxu0 %v985
          %1014 = vmatprep.subr.bf16.mxu0 0
          %1015 = vmatpush1.bf16.xpose.msra.mxu0 %v984
          %1016 = vmatprep.subr.bf16.mxu0 0
          %1017 = vmatpush2.bf16.xpose.msra.mxu0 0
          %1018 = vmatprep.subr.bf16.mxu0 0
          %1019 = vmatpush2.bf16.xpose.msra.mxu0 0
          %1020 = vmatprep.subr.bf16.mxu0 0
          %1021 = vmatpush2.bf16.xpose.msra.mxu0 0
          %1022 = vmatprep.subr.bf16.mxu0 0
          %1023 = vmatpush2.bf16.xpose.msra.mxu0 0
          %1024 = vmatprep.subr.bf16.mxu0 0
          %1025 = vmatpush2.bf16.xpose.msra.mxu0 0
          %1026 = vmatprep.subr.bf16.mxu0 0
          %1027 = vmatpush2.bf16.xpose.msra.mxu0 0
          %1028 = vmatprep.subr.bf16.mxu0 0
          %1029 = vmatpush2.bf16.xpose.msra.mxu0 0
          %1030 = vmatprep.subr.bf16.mxu0 0
          %1031 = vmatpush2.bf16.xpose.msra.mxu0 0
          %1032 = vmatprep.mubr.bf16.mxu0 0
          %1033 = vmatmul.mubr.bf16.gmra.mxu0 %v928
          %v1034 = vpop.f32.mrf.mxu0
          %v1035 = vadd.f32 0.0, %v1034
          %v1036 = vpop.f32.mrf.mxu0
          %v1037 = vpop.f32.mrf.mxu0
          %v1038 = vadd.f32 0.0, %v1037
          %v1039 = vpop.f32.mrf.mxu0
          %1040 = vmatprep.mubr.bf16.mxu0 0
          %1041 = vmatmul.mubr.bf16.gmra.mxu0 %v929
          %v1042 = vpop.f32.mrf.mxu0
          %v1043 = vadd.f32 0.0, %v1042
          %v1044 = vpop.f32.mrf.mxu0
          %v1045 = vpop.f32.mrf.mxu0
          %v1046 = vadd.f32 0.0, %v1045
          %v1047 = vpop.f32.mrf.mxu0
          %1048 = vmatprep.mubr.bf16.mxu0 0
          %1049 = vmatmul.mubr.bf16.gmra.mxu0 %v930
          %v1050 = vpop.f32.mrf.mxu0
          %v1051 = vadd.f32 0.0, %v1050
          %v1052 = vpop.f32.mrf.mxu0
          %v1053 = vpop.f32.mrf.mxu0
          %v1054 = vadd.f32 0.0, %v1053
          %v1055 = vpop.f32.mrf.mxu0
          %1056 = vmatprep.mubr.bf16.mxu0 0
          %1057 = vmatmul.mubr.bf16.gmra.mxu0 %v931
          %v1058 = vpop.f32.mrf.mxu0
          %v1059 = vadd.f32 0.0, %v1058
          %v1060 = vpop.f32.mrf.mxu0
          %v1061 = vpop.f32.mrf.mxu0
          %v1062 = vadd.f32 0.0, %v1061
          %v1063 = vpop.f32.mrf.mxu0
          %1064 = vmatprep.mubr.bf16.mxu0 0
          %1065 = vmatmul.mubr.bf16.gmra.mxu0 %v932
          %v1066 = vpop.f32.mrf.mxu0
          %v1067 = vadd.f32 0.0, %v1066
          %v1068 = vpop.f32.mrf.mxu0
          %v1069 = vpop.f32.mrf.mxu0
          %v1070 = vadd.f32 0.0, %v1069
          %v1071 = vpop.f32.mrf.mxu0
          %1072 = vmatprep.mubr.bf16.mxu0 0
          %1073 = vmatmul.mubr.bf16.gmra.mxu0 %v933
          %v1074 = vpop.f32.mrf.mxu0
          %v1075 = vadd.f32 0.0, %v1074
          %v1076 = vpop.f32.mrf.mxu0
          %v1077 = vpop.f32.mrf.mxu0
          %v1078 = vadd.f32 0.0, %v1077
          %v1079 = vpop.f32.mrf.mxu0
          %1080 = vmatprep.mubr.bf16.mxu0 0
          %1081 = vmatmul.mubr.bf16.gmra.mxu0 %v934
          %v1082 = vpop.f32.mrf.mxu0
          %v1083 = vadd.f32 0.0, %v1082
          %v1084 = vpop.f32.mrf.mxu0
          %v1085 = vpop.f32.mrf.mxu0
          %v1086 = vadd.f32 0.0, %v1085
          %v1087 = vpop.f32.mrf.mxu0
          %1088 = vmatprep.mubr.bf16.mxu0 0
          %1089 = vmatmul.mubr.bf16.gmra.mxu0 %v935
          %v1090 = vpop.f32.mrf.mxu0
          %v1091 = vadd.f32 0.0, %v1090
          %v1092 = vpop.f32.mrf.mxu0
          %v1093 = vpop.f32.mrf.mxu0
          %v1094 = vadd.f32 0.0, %v1093
          %v1095 = vpop.f32.mrf.mxu0
          %1096 = vdwg.mxu0
          %v1097 = vld [vmem:[%s4] sm:$0xff]
          %v1098 = vld [vmem:[%s4 + $0x8] sm:$0xff]
          %v1099 = vld [vmem:[%s4 + $0x10] sm:$0xff]
          %v1100 = vld [vmem:[%s4 + $0x18] sm:$0xff]
          %v1101 = vld [vmem:[%s4 + $0x20] sm:$0xff]
          %v1102 = vld [vmem:[%s4 + $0x28] sm:$0xff]
          %v1103 = vld [vmem:[%s4 + $0x30] sm:$0xff]
          %v1104 = vld [vmem:[%s4 + $0x38] sm:$0xff]
          %v1105 = vld [vmem:[%s4 + $0x40] sm:$0xff]
          %v1106 = vld [vmem:[%s4 + $0x48] sm:$0xff]
          %v1107 = vld [vmem:[%s4 + $0x50] sm:$0xff]
          %v1108 = vld [vmem:[%s4 + $0x58] sm:$0xff]
          %v1109 = vld [vmem:[%s4 + $0x60] sm:$0xff]
          %v1110 = vld [vmem:[%s4 + $0x68] sm:$0xff]
          %v1111 = vld [vmem:[%s4 + $0x70] sm:$0xff]
          %v1112 = vld [vmem:[%s4 + $0x78] sm:$0xff]
          %1114 = vset.pattern.permute.xlu0 0
          %1115 = vperm.xlu0 %1114, %v1097
          %v1116 = vpop.permute.xlu0 %1115
          %1119 = vset.pattern.permute.xlu0 0
          %1120 = vperm.xlu0 %1119, %v1098
          %v1121 = vpop.permute.xlu0 %1120
          %1124 = vset.pattern.permute.xlu0 0
          %1125 = vperm.xlu0 %1124, %v1099
          %v1126 = vpop.permute.xlu0 %1125
          %1129 = vset.pattern.permute.xlu0 0
          %1130 = vperm.xlu0 %1129, %v1100
          %v1131 = vpop.permute.xlu0 %1130
          %1134 = vset.pattern.permute.xlu0 0
          %1135 = vperm.xlu0 %1134, %v1101
          %v1136 = vpop.permute.xlu0 %1135
          %1139 = vset.pattern.permute.xlu0 0
          %1140 = vperm.xlu0 %1139, %v1102
          %v1141 = vpop.permute.xlu0 %1140
          %1144 = vset.pattern.permute.xlu0 0
          %1145 = vperm.xlu0 %1144, %v1103
          %v1146 = vpop.permute.xlu0 %1145
          %1149 = vset.pattern.permute.xlu0 0
          %1150 = vperm.xlu0 %1149, %v1104
          %v1151 = vpop.permute.xlu0 %1150
          %1154 = vset.pattern.permute.xlu0 0
          %1155 = vperm.xlu0 %1154, %v1105
          %v1156 = vpop.permute.xlu0 %1155
          %1159 = vset.pattern.permute.xlu0 0
          %1160 = vperm.xlu0 %1159, %v1106
          %v1161 = vpop.permute.xlu0 %1160
          %1164 = vset.pattern.permute.xlu0 0
          %1165 = vperm.xlu0 %1164, %v1107
          %v1166 = vpop.permute.xlu0 %1165
          %1169 = vset.pattern.permute.xlu0 0
          %1170 = vperm.xlu0 %1169, %v1108
          %v1171 = vpop.permute.xlu0 %1170
          %1174 = vset.pattern.permute.xlu0 0
          %1175 = vperm.xlu0 %1174, %v1109
          %v1176 = vpop.permute.xlu0 %1175
          %1179 = vset.pattern.permute.xlu0 0
          %1180 = vperm.xlu0 %1179, %v1110
          %v1181 = vpop.permute.xlu0 %1180
          %1184 = vset.pattern.permute.xlu0 0
          %1185 = vperm.xlu0 %1184, %v1111
          %v1186 = vpop.permute.xlu0 %1185
          %1189 = vset.pattern.permute.xlu0 0
          %1190 = vperm.xlu0 %1189, %v1112
          %v1191 = vpop.permute.xlu0 %1190
          %v1193 = vmul.f32 %v1116, %v1035
          %v1194 = vmul.f32 %v1121, %v1038
          %v1195 = vmul.f32 %v1126, %v1043
          %v1196 = vmul.f32 %v1131, %v1046
          %v1197 = vmul.f32 %v1136, %v1051
          %v1198 = vmul.f32 %v1141, %v1054
          %v1199 = vmul.f32 %v1146, %v1059
          %v1200 = vmul.f32 %v1151, %v1062
          %v1201 = vmul.f32 %v1156, %v1067
          %v1202 = vmul.f32 %v1161, %v1070
          %v1203 = vmul.f32 %v1166, %v1075
          %v1204 = vmul.f32 %v1171, %v1078
          %v1205 = vmul.f32 %v1176, %v1083
          %v1206 = vmul.f32 %v1181, %v1086
          %v1207 = vmul.f32 %v1186, %v1091
          %v1208 = vmul.f32 %v1191, %v1094
          %v1209 = vpack.c.bf16 %v1194, %v1193
          %v1210 = vpack.c.bf16 %v1196, %v1195
          %v1211 = vpack.c.bf16 %v1198, %v1197
          %v1212 = vpack.c.bf16 %v1200, %v1199
          %v1213 = vpack.c.bf16 %v1202, %v1201
          %v1214 = vpack.c.bf16 %v1204, %v1203
          %v1215 = vpack.c.bf16 %v1206, %v1205
          %v1216 = vpack.c.bf16 %v1208, %v1207
          %v1225 = vunpack.c.l.b16 %v1209
          %v1226 = vunpack.c.h.b16 %v1209
          %v1227 = vunpack.c.l.b16 %v1210
          %v1228 = vunpack.c.h.b16 %v1210
          %v1229 = vunpack.c.l.b16 %v1211
          %v1230 = vunpack.c.h.b16 %v1211
          %v1231 = vunpack.c.l.b16 %v1212
          %v1232 = vunpack.c.h.b16 %v1212
          %v1233 = vunpack.c.l.b16 %v1213
          %v1234 = vunpack.c.h.b16 %v1213
          %v1235 = vunpack.c.l.b16 %v1214
          %v1236 = vunpack.c.h.b16 %v1214
          %v1237 = vunpack.c.l.b16 %v1215
          %v1238 = vunpack.c.h.b16 %v1215
          %v1239 = vunpack.c.l.b16 %v1216
          %v1240 = vunpack.c.h.b16 %v1216
          %v1241 = vpack.c.b16 %v1225, %v1225
          %v1242 = vpack.c.b16 %v1226, %v1226
          %v1243 = vpack.c.b16 %v1227, %v1227
          %v1244 = vpack.c.b16 %v1228, %v1228
          %v1245 = vpack.c.b16 %v1229, %v1229
          %v1246 = vpack.c.b16 %v1230, %v1230
          %v1247 = vpack.c.b16 %v1231, %v1231
          %v1248 = vpack.c.b16 %v1232, %v1232
          %v1249 = vpack.c.b16 %v1233, %v1233
          %v1250 = vpack.c.b16 %v1234, %v1234
          %v1251 = vpack.c.b16 %v1235, %v1235
          %v1252 = vpack.c.b16 %v1236, %v1236
          %v1253 = vpack.c.b16 %v1237, %v1237
          %v1254 = vpack.c.b16 %v1238, %v1238
          %v1255 = vpack.c.b16 %v1239, %v1239
          %v1256 = vpack.c.b16 %v1240, %v1240
          %1273 = vst [vmem:[#allocation3] sm:$0xf] %v1241
          %1274 = vst [vmem:[#allocation3 + $0x4] sm:$0xf] %v1242
          %1275 = vst [vmem:[#allocation3 + $0x8] sm:$0xf] %v1243
          %1276 = vst [vmem:[#allocation3 + $0xc] sm:$0xf] %v1244
          %1277 = vst [vmem:[#allocation3 + $0x10] sm:$0xf] %v1245
          %1278 = vst [vmem:[#allocation3 + $0x14] sm:$0xf] %v1246
          %1279 = vst [vmem:[#allocation3 + $0x18] sm:$0xf] %v1247
          %1280 = vst [vmem:[#allocation3 + $0x1c] sm:$0xf] %v1248
          %1281 = vst [vmem:[#allocation3 + $0x20] sm:$0xf] %v1249
          %1282 = vst [vmem:[#allocation3 + $0x24] sm:$0xf] %v1250
          %1283 = vst [vmem:[#allocation3 + $0x28] sm:$0xf] %v1251
          %1284 = vst [vmem:[#allocation3 + $0x2c] sm:$0xf] %v1252
          %1285 = vst [vmem:[#allocation3 + $0x30] sm:$0xf] %v1253
          %1286 = vst [vmem:[#allocation3 + $0x34] sm:$0xf] %v1254
          %1287 = vst [vmem:[#allocation3 + $0x38] sm:$0xf] %v1255
          %1288 = vst [vmem:[#allocation3 + $0x3c] sm:$0xf] %v1256
          %v1289 = vld [vmem:[#allocation10] sm:$0xff]
          %v1290 = vld [vmem:[#allocation10 + $0x8] sm:$0xff]
          %v1291 = vld [vmem:[#allocation10 + $0x10] sm:$0xff]
          %v1292 = vld [vmem:[#allocation10 + $0x18] sm:$0xff]
          %v1293 = vld [vmem:[#allocation10 + $0x20] sm:$0xff]
          %v1294 = vld [vmem:[#allocation10 + $0x28] sm:$0xff]
          %v1295 = vld [vmem:[#allocation10 + $0x30] sm:$0xff]
          %v1296 = vld [vmem:[#allocation10 + $0x38] sm:$0xff]
          %v1297 = vld [vmem:[#allocation10 + $0x40] sm:$0xff]
          %v1298 = vld [vmem:[#allocation10 + $0x48] sm:$0xff]
          %v1299 = vld [vmem:[#allocation10 + $0x50] sm:$0xff]
          %v1300 = vld [vmem:[#allocation10 + $0x58] sm:$0xff]
          %v1301 = vld [vmem:[#allocation10 + $0x60] sm:$0xff]
          %v1302 = vld [vmem:[#allocation10 + $0x68] sm:$0xff]
          %v1303 = vld [vmem:[#allocation10 + $0x70] sm:$0xff]
          %v1304 = vld [vmem:[#allocation10 + $0x78] sm:$0xff]
          %1305 = vst [vmem:[#allocation4] sm:$0xff] %v1289
          %1306 = vst [vmem:[#allocation4 + $0x8] sm:$0xff] %v1290
          %1307 = vst [vmem:[#allocation4 + $0x10] sm:$0xff] %v1291
          %1308 = vst [vmem:[#allocation4 + $0x18] sm:$0xff] %v1292
          %1309 = vst [vmem:[#allocation4 + $0x20] sm:$0xff] %v1293
          %1310 = vst [vmem:[#allocation4 + $0x28] sm:$0xff] %v1294
          %1311 = vst [vmem:[#allocation4 + $0x30] sm:$0xff] %v1295
          %1312 = vst [vmem:[#allocation4 + $0x38] sm:$0xff] %v1296
          %1313 = vst [vmem:[#allocation4 + $0x40] sm:$0xff] %v1297
          %1314 = vst [vmem:[#allocation4 + $0x48] sm:$0xff] %v1298
          %1315 = vst [vmem:[#allocation4 + $0x50] sm:$0xff] %v1299
          %1316 = vst [vmem:[#allocation4 + $0x58] sm:$0xff] %v1300
          %1317 = vst [vmem:[#allocation4 + $0x60] sm:$0xff] %v1301
          %1318 = vst [vmem:[#allocation4 + $0x68] sm:$0xff] %v1302
          %1319 = vst [vmem:[#allocation4 + $0x70] sm:$0xff] %v1303
          %1320 = vst [vmem:[#allocation4 + $0x78] sm:$0xff] %v1304
        $region84: #{tpu_custom_call.1} parent=59 // pred_fallthru
          _
        // Predicated region
        $region85: #{tpu_custom_call.1} parent=59 // pred_check
          %p1321 = pneg %p907
        $region86: #{tpu_custom_call.1} parent=59 // pred_check_branch
          %1323 = sbr.rel (%p1321) target = $region88
        $region87: #{tpu_custom_call.1} parent=59 // pred_region
          %v1324 = vld [vmem:[%s501] sm:$0xf]
          %v1325 = vld [vmem:[%s501 + $0x4] sm:$0xf]
          %v1326 = vld [vmem:[%s501 + $0x8] sm:$0xf]
          %v1327 = vld [vmem:[%s501 + $0xc] sm:$0xf]
          %v1328 = vld [vmem:[%s501 + $0x10] sm:$0xf]
          %v1329 = vld [vmem:[%s501 + $0x14] sm:$0xf]
          %v1330 = vld [vmem:[%s501 + $0x18] sm:$0xf]
          %v1331 = vld [vmem:[%s501 + $0x1c] sm:$0xf]
          %v1332 = vld [vmem:[%s501 + $0x20] sm:$0xf]
          %v1333 = vld [vmem:[%s501 + $0x24] sm:$0xf]
          %v1334 = vld [vmem:[%s501 + $0x28] sm:$0xf]
          %v1335 = vld [vmem:[%s501 + $0x2c] sm:$0xf]
          %v1336 = vld [vmem:[%s501 + $0x30] sm:$0xf]
          %v1337 = vld [vmem:[%s501 + $0x34] sm:$0xf]
          %v1338 = vld [vmem:[%s501 + $0x38] sm:$0xf]
          %v1339 = vld [vmem:[%s501 + $0x3c] sm:$0xf]
          %v1340 = vld [vmem:[%s501 + $0x40] sm:$0xf]
          %v1341 = vld [vmem:[%s501 + $0x44] sm:$0xf]
          %v1342 = vld [vmem:[%s501 + $0x48] sm:$0xf]
          %v1343 = vld [vmem:[%s501 + $0x4c] sm:$0xf]
          %v1344 = vld [vmem:[%s501 + $0x50] sm:$0xf]
          %v1345 = vld [vmem:[%s501 + $0x54] sm:$0xf]
          %v1346 = vld [vmem:[%s501 + $0x58] sm:$0xf]
          %v1347 = vld [vmem:[%s501 + $0x5c] sm:$0xf]
          %v1348 = vld [vmem:[%s501 + $0x60] sm:$0xf]
          %v1349 = vld [vmem:[%s501 + $0x64] sm:$0xf]
          %v1350 = vld [vmem:[%s501 + $0x68] sm:$0xf]
          %v1351 = vld [vmem:[%s501 + $0x6c] sm:$0xf]
          %v1352 = vld [vmem:[%s501 + $0x70] sm:$0xf]
          %v1353 = vld [vmem:[%s501 + $0x74] sm:$0xf]
          %v1354 = vld [vmem:[%s501 + $0x78] sm:$0xf]
          %v1355 = vld [vmem:[%s501 + $0x7c] sm:$0xf]
          %v1356 = vld [vmem:[#allocation3] sm:$0xf]
          %v1357 = vld [vmem:[#allocation3 + $0x4] sm:$0xf]
          %v1358 = vld [vmem:[#allocation3 + $0x8] sm:$0xf]
          %v1359 = vld [vmem:[#allocation3 + $0xc] sm:$0xf]
          %v1360 = vld [vmem:[#allocation3 + $0x10] sm:$0xf]
          %v1361 = vld [vmem:[#allocation3 + $0x14] sm:$0xf]
          %v1362 = vld [vmem:[#allocation3 + $0x18] sm:$0xf]
          %v1363 = vld [vmem:[#allocation3 + $0x1c] sm:$0xf]
          %v1364 = vld [vmem:[#allocation3 + $0x20] sm:$0xf]
          %v1365 = vld [vmem:[#allocation3 + $0x24] sm:$0xf]
          %v1366 = vld [vmem:[#allocation3 + $0x28] sm:$0xf]
          %v1367 = vld [vmem:[#allocation3 + $0x2c] sm:$0xf]
          %v1368 = vld [vmem:[#allocation3 + $0x30] sm:$0xf]
          %v1369 = vld [vmem:[#allocation3 + $0x34] sm:$0xf]
          %v1370 = vld [vmem:[#allocation3 + $0x38] sm:$0xf]
          %v1371 = vld [vmem:[#allocation3 + $0x3c] sm:$0xf]
          %v1404 = vunpack.c.l.b16 %v1324
          %v1405 = vunpack.c.l.b16 %v1325
          %v1406 = vunpack.c.l.b16 %v1326
          %v1407 = vunpack.c.l.b16 %v1327
          %v1408 = vunpack.c.l.b16 %v1328
          %v1409 = vunpack.c.l.b16 %v1329
          %v1410 = vunpack.c.l.b16 %v1330
          %v1411 = vunpack.c.l.b16 %v1331
          %v1412 = vunpack.c.l.b16 %v1332
          %v1413 = vunpack.c.l.b16 %v1333
          %v1414 = vunpack.c.l.b16 %v1334
          %v1415 = vunpack.c.l.b16 %v1335
          %v1416 = vunpack.c.l.b16 %v1336
          %v1417 = vunpack.c.l.b16 %v1337
          %v1418 = vunpack.c.l.b16 %v1338
          %v1419 = vunpack.c.l.b16 %v1339
          %v1420 = vunpack.c.l.b16 %v1340
          %v1421 = vunpack.c.l.b16 %v1341
          %v1422 = vunpack.c.l.b16 %v1342
          %v1423 = vunpack.c.l.b16 %v1343
          %v1424 = vunpack.c.l.b16 %v1344
          %v1425 = vunpack.c.l.b16 %v1345
          %v1426 = vunpack.c.l.b16 %v1346
          %v1427 = vunpack.c.l.b16 %v1347
          %v1428 = vunpack.c.l.b16 %v1348
          %v1429 = vunpack.c.l.b16 %v1349
          %v1430 = vunpack.c.l.b16 %v1350
          %v1431 = vunpack.c.l.b16 %v1351
          %v1432 = vunpack.c.l.b16 %v1352
          %v1433 = vunpack.c.l.b16 %v1353
          %v1434 = vunpack.c.l.b16 %v1354
          %v1435 = vunpack.c.l.b16 %v1355
          %v1436 = vpack.c.b16 %v1405, %v1404
          %v1437 = vpack.c.b16 %v1407, %v1406
          %v1438 = vpack.c.b16 %v1409, %v1408
          %v1439 = vpack.c.b16 %v1411, %v1410
          %v1440 = vpack.c.b16 %v1413, %v1412
          %v1441 = vpack.c.b16 %v1415, %v1414
          %v1442 = vpack.c.b16 %v1417, %v1416
          %v1443 = vpack.c.b16 %v1419, %v1418
          %v1444 = vpack.c.b16 %v1421, %v1420
          %v1445 = vpack.c.b16 %v1423, %v1422
          %v1446 = vpack.c.b16 %v1425, %v1424
          %v1447 = vpack.c.b16 %v1427, %v1426
          %v1448 = vpack.c.b16 %v1429, %v1428
          %v1449 = vpack.c.b16 %v1431, %v1430
          %v1450 = vpack.c.b16 %v1433, %v1432
          %v1451 = vpack.c.b16 %v1435, %v1434
          %v1484 = vunpack.c.l.b16 %v1356
          %v1485 = vunpack.c.l.b16 %v1357
          %v1486 = vunpack.c.l.b16 %v1358
          %v1487 = vunpack.c.l.b16 %v1359
          %v1488 = vunpack.c.l.b16 %v1360
          %v1489 = vunpack.c.l.b16 %v1361
          %v1490 = vunpack.c.l.b16 %v1362
          %v1491 = vunpack.c.l.b16 %v1363
          %v1492 = vunpack.c.l.b16 %v1364
          %v1493 = vunpack.c.l.b16 %v1365
          %v1494 = vunpack.c.l.b16 %v1366
          %v1495 = vunpack.c.l.b16 %v1367
          %v1496 = vunpack.c.l.b16 %v1368
          %v1497 = vunpack.c.l.b16 %v1369
          %v1498 = vunpack.c.l.b16 %v1370
          %v1499 = vunpack.c.l.b16 %v1371
          %v1500 = vpack.c.b16 %v1485, %v1484
          %v1501 = vpack.c.b16 %v1487, %v1486
          %v1502 = vpack.c.b16 %v1489, %v1488
          %v1503 = vpack.c.b16 %v1491, %v1490
          %v1504 = vpack.c.b16 %v1493, %v1492
          %v1505 = vpack.c.b16 %v1495, %v1494
          %v1506 = vpack.c.b16 %v1497, %v1496
          %v1507 = vpack.c.b16 %v1499, %v1498
          %1516 = vmatprep.subr.bf16.mxu0 0
          %1517 = vmatpush1.bf16.msra.mxu0 %v1507
          %1518 = vmatprep.subr.bf16.mxu0 0
          %1519 = vmatpush1.bf16.msra.mxu0 %v1506
          %1520 = vmatprep.subr.bf16.mxu0 0
          %1521 = vmatpush1.bf16.msra.mxu0 %v1505
          %1522 = vmatprep.subr.bf16.mxu0 0
          %1523 = vmatpush1.bf16.msra.mxu0 %v1504
          %1524 = vmatprep.subr.bf16.mxu0 0
          %1525 = vmatpush1.bf16.msra.mxu0 %v1503
          %1526 = vmatprep.subr.bf16.mxu0 0
          %1527 = vmatpush1.bf16.msra.mxu0 %v1502
          %1528 = vmatprep.subr.bf16.mxu0 0
          %1529 = vmatpush1.bf16.msra.mxu0 %v1501
          %1530 = vmatprep.subr.bf16.mxu0 0
          %1531 = vmatpush1.bf16.msra.mxu0 %v1500
          %1532 = vmatprep.subr.bf16.mxu0 0
          %1533 = vmatpush2.bf16.msra.mxu0 0
          %1534 = vmatprep.subr.bf16.mxu0 0
          %1535 = vmatpush2.bf16.msra.mxu0 0
          %1536 = vmatprep.subr.bf16.mxu0 0
          %1537 = vmatpush2.bf16.msra.mxu0 0
          %1538 = vmatprep.subr.bf16.mxu0 0
          %1539 = vmatpush2.bf16.msra.mxu0 0
          %1540 = vmatprep.subr.bf16.mxu0 0
          %1541 = vmatpush2.bf16.msra.mxu0 0
          %1542 = vmatprep.subr.bf16.mxu0 0
          %1543 = vmatpush2.bf16.msra.mxu0 0
          %1544 = vmatprep.subr.bf16.mxu0 0
          %1545 = vmatpush2.bf16.msra.mxu0 0
          %1546 = vmatprep.subr.bf16.mxu0 0
          %1547 = vmatpush2.bf16.msra.mxu0 0
          %1548 = vmatprep.mubr.bf16.mxu0 0
          %1549 = vmatmul.mubr.bf16.gmra.mxu0 %v1436
          %v1550 = vpop.f32.mrf.mxu0
          %v1551 = vadd.f32 0.0, %v1550
          %v1552 = vpop.f32.mrf.mxu0
          %v1553 = vpop.f32.mrf.mxu0
          %v1554 = vadd.f32 0.0, %v1553
          %v1555 = vpop.f32.mrf.mxu0
          %1556 = vmatprep.mubr.bf16.mxu0 0
          %1557 = vmatmul.mubr.bf16.gmra.mxu0 %v1437
          %v1558 = vpop.f32.mrf.mxu0
          %v1559 = vadd.f32 0.0, %v1558
          %v1560 = vpop.f32.mrf.mxu0
          %v1561 = vpop.f32.mrf.mxu0
          %v1562 = vadd.f32 0.0, %v1561
          %v1563 = vpop.f32.mrf.mxu0
          %1564 = vmatprep.mubr.bf16.mxu0 0
          %1565 = vmatmul.mubr.bf16.gmra.mxu0 %v1438
          %v1566 = vpop.f32.mrf.mxu0
          %v1567 = vadd.f32 0.0, %v1566
          %v1568 = vpop.f32.mrf.mxu0
          %v1569 = vpop.f32.mrf.mxu0
          %v1570 = vadd.f32 0.0, %v1569
          %v1571 = vpop.f32.mrf.mxu0
          %1572 = vmatprep.mubr.bf16.mxu0 0
          %1573 = vmatmul.mubr.bf16.gmra.mxu0 %v1439
          %v1574 = vpop.f32.mrf.mxu0
          %v1575 = vadd.f32 0.0, %v1574
          %v1576 = vpop.f32.mrf.mxu0
          %v1577 = vpop.f32.mrf.mxu0
          %v1578 = vadd.f32 0.0, %v1577
          %v1579 = vpop.f32.mrf.mxu0
          %1580 = vmatprep.mubr.bf16.mxu0 0
          %1581 = vmatmul.mubr.bf16.gmra.mxu0 %v1440
          %v1582 = vpop.f32.mrf.mxu0
          %v1583 = vadd.f32 0.0, %v1582
          %v1584 = vpop.f32.mrf.mxu0
          %v1585 = vpop.f32.mrf.mxu0
          %v1586 = vadd.f32 0.0, %v1585
          %v1587 = vpop.f32.mrf.mxu0
          %1588 = vmatprep.mubr.bf16.mxu0 0
          %1589 = vmatmul.mubr.bf16.gmra.mxu0 %v1441
          %v1590 = vpop.f32.mrf.mxu0
          %v1591 = vadd.f32 0.0, %v1590
          %v1592 = vpop.f32.mrf.mxu0
          %v1593 = vpop.f32.mrf.mxu0
          %v1594 = vadd.f32 0.0, %v1593
          %v1595 = vpop.f32.mrf.mxu0
          %1596 = vmatprep.mubr.bf16.mxu0 0
          %1597 = vmatmul.mubr.bf16.gmra.mxu0 %v1442
          %v1598 = vpop.f32.mrf.mxu0
          %v1599 = vadd.f32 0.0, %v1598
          %v1600 = vpop.f32.mrf.mxu0
          %v1601 = vpop.f32.mrf.mxu0
          %v1602 = vadd.f32 0.0, %v1601
          %v1603 = vpop.f32.mrf.mxu0
          %1604 = vmatprep.mubr.bf16.mxu0 0
          %1605 = vmatmul.mubr.bf16.gmra.mxu0 %v1443
          %v1606 = vpop.f32.mrf.mxu0
          %v1607 = vadd.f32 0.0, %v1606
          %v1608 = vpop.f32.mrf.mxu0
          %v1609 = vpop.f32.mrf.mxu0
          %v1610 = vadd.f32 0.0, %v1609
          %v1611 = vpop.f32.mrf.mxu0
          %1612 = vmatprep.mubr.bf16.mxu0 0
          %1613 = vmatmul.mubr.bf16.gmra.mxu0 %v1444
          %v1614 = vpop.f32.mrf.mxu0
          %v1615 = vadd.f32 0.0, %v1614
          %v1616 = vpop.f32.mrf.mxu0
          %v1617 = vpop.f32.mrf.mxu0
          %v1618 = vadd.f32 0.0, %v1617
          %v1619 = vpop.f32.mrf.mxu0
          %1620 = vmatprep.mubr.bf16.mxu0 0
          %1621 = vmatmul.mubr.bf16.gmra.mxu0 %v1445
          %v1622 = vpop.f32.mrf.mxu0
          %v1623 = vadd.f32 0.0, %v1622
          %v1624 = vpop.f32.mrf.mxu0
          %v1625 = vpop.f32.mrf.mxu0
          %v1626 = vadd.f32 0.0, %v1625
          %v1627 = vpop.f32.mrf.mxu0
          %1628 = vmatprep.mubr.bf16.mxu0 0
          %1629 = vmatmul.mubr.bf16.gmra.mxu0 %v1446
          %v1630 = vpop.f32.mrf.mxu0
          %v1631 = vadd.f32 0.0, %v1630
          %v1632 = vpop.f32.mrf.mxu0
          %v1633 = vpop.f32.mrf.mxu0
          %v1634 = vadd.f32 0.0, %v1633
          %v1635 = vpop.f32.mrf.mxu0
          %1636 = vmatprep.mubr.bf16.mxu0 0
          %1637 = vmatmul.mubr.bf16.gmra.mxu0 %v1447
          %v1638 = vpop.f32.mrf.mxu0
          %v1639 = vadd.f32 0.0, %v1638
          %v1640 = vpop.f32.mrf.mxu0
          %v1641 = vpop.f32.mrf.mxu0
          %v1642 = vadd.f32 0.0, %v1641
          %v1643 = vpop.f32.mrf.mxu0
          %1644 = vmatprep.mubr.bf16.mxu0 0
          %1645 = vmatmul.mubr.bf16.gmra.mxu0 %v1448
          %v1646 = vpop.f32.mrf.mxu0
          %v1647 = vadd.f32 0.0, %v1646
          %v1648 = vpop.f32.mrf.mxu0
          %v1649 = vpop.f32.mrf.mxu0
          %v1650 = vadd.f32 0.0, %v1649
          %v1651 = vpop.f32.mrf.mxu0
          %1652 = vmatprep.mubr.bf16.mxu0 0
          %1653 = vmatmul.mubr.bf16.gmra.mxu0 %v1449
          %v1654 = vpop.f32.mrf.mxu0
          %v1655 = vadd.f32 0.0, %v1654
          %v1656 = vpop.f32.mrf.mxu0
          %v1657 = vpop.f32.mrf.mxu0
          %v1658 = vadd.f32 0.0, %v1657
          %v1659 = vpop.f32.mrf.mxu0
          %1660 = vmatprep.mubr.bf16.mxu0 0
          %1661 = vmatmul.mubr.bf16.gmra.mxu0 %v1450
          %v1662 = vpop.f32.mrf.mxu0
          %v1663 = vadd.f32 0.0, %v1662
          %v1664 = vpop.f32.mrf.mxu0
          %v1665 = vpop.f32.mrf.mxu0
          %v1666 = vadd.f32 0.0, %v1665
          %v1667 = vpop.f32.mrf.mxu0
          %1668 = vmatprep.mubr.bf16.mxu0 0
          %1669 = vmatmul.mubr.bf16.gmra.mxu0 %v1451
          %v1670 = vpop.f32.mrf.mxu0
          %v1671 = vadd.f32 0.0, %v1670
          %v1672 = vpop.f32.mrf.mxu0
          %v1673 = vpop.f32.mrf.mxu0
          %v1674 = vadd.f32 0.0, %v1673
          %v1675 = vpop.f32.mrf.mxu0
          %1676 = vdwg.mxu0
          %v1677 = vld [vmem:[%s509] sm:$0xff]
          %v1678 = vld [vmem:[%s509 + $0x8] sm:$0xff]
          %v1679 = vld [vmem:[%s509 + $0x10] sm:$0xff]
          %v1680 = vld [vmem:[%s509 + $0x18] sm:$0xff]
          %v1681 = vld [vmem:[%s509 + $0x20] sm:$0xff]
          %v1682 = vld [vmem:[%s509 + $0x28] sm:$0xff]
          %v1683 = vld [vmem:[%s509 + $0x30] sm:$0xff]
          %v1684 = vld [vmem:[%s509 + $0x38] sm:$0xff]
          %v1685 = vld [vmem:[%s509 + $0x40] sm:$0xff]
          %v1686 = vld [vmem:[%s509 + $0x48] sm:$0xff]
          %v1687 = vld [vmem:[%s509 + $0x50] sm:$0xff]
          %v1688 = vld [vmem:[%s509 + $0x58] sm:$0xff]
          %v1689 = vld [vmem:[%s509 + $0x60] sm:$0xff]
          %v1690 = vld [vmem:[%s509 + $0x68] sm:$0xff]
          %v1691 = vld [vmem:[%s509 + $0x70] sm:$0xff]
          %v1692 = vld [vmem:[%s509 + $0x78] sm:$0xff]
          %v1693 = vld [vmem:[%s509 + $0x80] sm:$0xff]
          %v1694 = vld [vmem:[%s509 + $0x88] sm:$0xff]
          %v1695 = vld [vmem:[%s509 + $0x90] sm:$0xff]
          %v1696 = vld [vmem:[%s509 + $0x98] sm:$0xff]
          %v1697 = vld [vmem:[%s509 + $0xa0] sm:$0xff]
          %v1698 = vld [vmem:[%s509 + $0xa8] sm:$0xff]
          %v1699 = vld [vmem:[%s509 + $0xb0] sm:$0xff]
          %v1700 = vld [vmem:[%s509 + $0xb8] sm:$0xff]
          %v1701 = vld [vmem:[%s509 + $0xc0] sm:$0xff]
          %v1702 = vld [vmem:[%s509 + $0xc8] sm:$0xff]
          %v1703 = vld [vmem:[%s509 + $0xd0] sm:$0xff]
          %v1704 = vld [vmem:[%s509 + $0xd8] sm:$0xff]
          %v1705 = vld [vmem:[%s509 + $0xe0] sm:$0xff]
          %v1706 = vld [vmem:[%s509 + $0xe8] sm:$0xff]
          %v1707 = vld [vmem:[%s509 + $0xf0] sm:$0xff]
          %v1708 = vld [vmem:[%s509 + $0xf8] sm:$0xff]
          %1710 = vset.pattern.permute.xlu0 0
          %1711 = vperm.xlu0 %1710, %v1677
          %v1712 = vpop.permute.xlu0 %1711
          %1715 = vset.pattern.permute.xlu0 0
          %1716 = vperm.xlu0 %1715, %v1678
          %v1717 = vpop.permute.xlu0 %1716
          %1720 = vset.pattern.permute.xlu0 0
          %1721 = vperm.xlu0 %1720, %v1679
          %v1722 = vpop.permute.xlu0 %1721
          %1725 = vset.pattern.permute.xlu0 0
          %1726 = vperm.xlu0 %1725, %v1680
          %v1727 = vpop.permute.xlu0 %1726
          %1730 = vset.pattern.permute.xlu0 0
          %1731 = vperm.xlu0 %1730, %v1681
          %v1732 = vpop.permute.xlu0 %1731
          %1735 = vset.pattern.permute.xlu0 0
          %1736 = vperm.xlu0 %1735, %v1682
          %v1737 = vpop.permute.xlu0 %1736
          %1740 = vset.pattern.permute.xlu0 0
          %1741 = vperm.xlu0 %1740, %v1683
          %v1742 = vpop.permute.xlu0 %1741
          %1745 = vset.pattern.permute.xlu0 0
          %1746 = vperm.xlu0 %1745, %v1684
          %v1747 = vpop.permute.xlu0 %1746
          %1750 = vset.pattern.permute.xlu0 0
          %1751 = vperm.xlu0 %1750, %v1685
          %v1752 = vpop.permute.xlu0 %1751
          %1755 = vset.pattern.permute.xlu0 0
          %1756 = vperm.xlu0 %1755, %v1686
          %v1757 = vpop.permute.xlu0 %1756
          %1760 = vset.pattern.permute.xlu0 0
          %1761 = vperm.xlu0 %1760, %v1687
          %v1762 = vpop.permute.xlu0 %1761
          %1765 = vset.pattern.permute.xlu0 0
          %1766 = vperm.xlu0 %1765, %v1688
          %v1767 = vpop.permute.xlu0 %1766
          %1770 = vset.pattern.permute.xlu0 0
          %1771 = vperm.xlu0 %1770, %v1689
          %v1772 = vpop.permute.xlu0 %1771
          %1775 = vset.pattern.permute.xlu0 0
          %1776 = vperm.xlu0 %1775, %v1690
          %v1777 = vpop.permute.xlu0 %1776
          %1780 = vset.pattern.permute.xlu0 0
          %1781 = vperm.xlu0 %1780, %v1691
          %v1782 = vpop.permute.xlu0 %1781
          %1785 = vset.pattern.permute.xlu0 0
          %1786 = vperm.xlu0 %1785, %v1692
          %v1787 = vpop.permute.xlu0 %1786
          %1790 = vset.pattern.permute.xlu0 0
          %1791 = vperm.xlu0 %1790, %v1693
          %v1792 = vpop.permute.xlu0 %1791
          %1795 = vset.pattern.permute.xlu0 0
          %1796 = vperm.xlu0 %1795, %v1694
          %v1797 = vpop.permute.xlu0 %1796
          %1800 = vset.pattern.permute.xlu0 0
          %1801 = vperm.xlu0 %1800, %v1695
          %v1802 = vpop.permute.xlu0 %1801
          %1805 = vset.pattern.permute.xlu0 0
          %1806 = vperm.xlu0 %1805, %v1696
          %v1807 = vpop.permute.xlu0 %1806
          %1810 = vset.pattern.permute.xlu0 0
          %1811 = vperm.xlu0 %1810, %v1697
          %v1812 = vpop.permute.xlu0 %1811
          %1815 = vset.pattern.permute.xlu0 0
          %1816 = vperm.xlu0 %1815, %v1698
          %v1817 = vpop.permute.xlu0 %1816
          %1820 = vset.pattern.permute.xlu0 0
          %1821 = vperm.xlu0 %1820, %v1699
          %v1822 = vpop.permute.xlu0 %1821
          %1825 = vset.pattern.permute.xlu0 0
          %1826 = vperm.xlu0 %1825, %v1700
          %v1827 = vpop.permute.xlu0 %1826
          %1830 = vset.pattern.permute.xlu0 0
          %1831 = vperm.xlu0 %1830, %v1701
          %v1832 = vpop.permute.xlu0 %1831
          %1835 = vset.pattern.permute.xlu0 0
          %1836 = vperm.xlu0 %1835, %v1702
          %v1837 = vpop.permute.xlu0 %1836
          %1840 = vset.pattern.permute.xlu0 0
          %1841 = vperm.xlu0 %1840, %v1703
          %v1842 = vpop.permute.xlu0 %1841
          %1845 = vset.pattern.permute.xlu0 0
          %1846 = vperm.xlu0 %1845, %v1704
          %v1847 = vpop.permute.xlu0 %1846
          %1850 = vset.pattern.permute.xlu0 0
          %1851 = vperm.xlu0 %1850, %v1705
          %v1852 = vpop.permute.xlu0 %1851
          %1855 = vset.pattern.permute.xlu0 0
          %1856 = vperm.xlu0 %1855, %v1706
          %v1857 = vpop.permute.xlu0 %1856
          %1860 = vset.pattern.permute.xlu0 0
          %1861 = vperm.xlu0 %1860, %v1707
          %v1862 = vpop.permute.xlu0 %1861
          %1865 = vset.pattern.permute.xlu0 0
          %1866 = vperm.xlu0 %1865, %v1708
          %v1867 = vpop.permute.xlu0 %1866
          %v1869 = vmul.f32 %v1712, %v1551
          %v1870 = vmul.f32 %v1717, %v1554
          %v1871 = vmul.f32 %v1722, %v1559
          %v1872 = vmul.f32 %v1727, %v1562
          %v1873 = vmul.f32 %v1732, %v1567
          %v1874 = vmul.f32 %v1737, %v1570
          %v1875 = vmul.f32 %v1742, %v1575
          %v1876 = vmul.f32 %v1747, %v1578
          %v1877 = vmul.f32 %v1752, %v1583
          %v1878 = vmul.f32 %v1757, %v1586
          %v1879 = vmul.f32 %v1762, %v1591
          %v1880 = vmul.f32 %v1767, %v1594
          %v1881 = vmul.f32 %v1772, %v1599
          %v1882 = vmul.f32 %v1777, %v1602
          %v1883 = vmul.f32 %v1782, %v1607
          %v1884 = vmul.f32 %v1787, %v1610
          %v1885 = vmul.f32 %v1792, %v1615
          %v1886 = vmul.f32 %v1797, %v1618
          %v1887 = vmul.f32 %v1802, %v1623
          %v1888 = vmul.f32 %v1807, %v1626
          %v1889 = vmul.f32 %v1812, %v1631
          %v1890 = vmul.f32 %v1817, %v1634
          %v1891 = vmul.f32 %v1822, %v1639
          %v1892 = vmul.f32 %v1827, %v1642
          %v1893 = vmul.f32 %v1832, %v1647
          %v1894 = vmul.f32 %v1837, %v1650
          %v1895 = vmul.f32 %v1842, %v1655
          %v1896 = vmul.f32 %v1847, %v1658
          %v1897 = vmul.f32 %v1852, %v1663
          %v1898 = vmul.f32 %v1857, %v1666
          %v1899 = vmul.f32 %v1862, %v1671
          %v1900 = vmul.f32 %v1867, %v1674
          %v1901 = vld [vmem:[%s6] sm:$0x1]
          %v1903 = vlaneseq
          %v1904 = vshrl.u32 %v1903, 7
          %v1905 = vsub.s32 0, %v1904
          %v1906 = vrot.slane %v1901, %v1905
          %v1908 = vadd.f32 %v1869, %v1906
          %v1909 = vadd.f32 %v1870, %v1906
          %v1910 = vadd.f32 %v1871, %v1906
          %v1911 = vadd.f32 %v1872, %v1906
          %v1912 = vadd.f32 %v1873, %v1906
          %v1913 = vadd.f32 %v1874, %v1906
          %v1914 = vadd.f32 %v1875, %v1906
          %v1915 = vadd.f32 %v1876, %v1906
          %v1916 = vadd.f32 %v1877, %v1906
          %v1917 = vadd.f32 %v1878, %v1906
          %v1918 = vadd.f32 %v1879, %v1906
          %v1919 = vadd.f32 %v1880, %v1906
          %v1920 = vadd.f32 %v1881, %v1906
          %v1921 = vadd.f32 %v1882, %v1906
          %v1922 = vadd.f32 %v1883, %v1906
          %v1923 = vadd.f32 %v1884, %v1906
          %v1924 = vadd.f32 %v1885, %v1906
          %v1925 = vadd.f32 %v1886, %v1906
          %v1926 = vadd.f32 %v1887, %v1906
          %v1927 = vadd.f32 %v1888, %v1906
          %v1928 = vadd.f32 %v1889, %v1906
          %v1929 = vadd.f32 %v1890, %v1906
          %v1930 = vadd.f32 %v1891, %v1906
          %v1931 = vadd.f32 %v1892, %v1906
          %v1932 = vadd.f32 %v1893, %v1906
          %v1933 = vadd.f32 %v1894, %v1906
          %v1934 = vadd.f32 %v1895, %v1906
          %v1935 = vadd.f32 %v1896, %v1906
          %v1936 = vadd.f32 %v1897, %v1906
          %v1937 = vadd.f32 %v1898, %v1906
          %v1938 = vadd.f32 %v1899, %v1906
          %v1939 = vadd.f32 %v1900, %v1906
          %vm1940 = vcmp.gt.f32.partialorder %v1908, 0.0
          %vm1941 = vcmp.gt.f32.partialorder %v1909, 0.0
          %vm1942 = vcmp.gt.f32.partialorder %v1910, 0.0
          %vm1943 = vcmp.gt.f32.partialorder %v1911, 0.0
          %vm1944 = vcmp.gt.f32.partialorder %v1912, 0.0
          %vm1945 = vcmp.gt.f32.partialorder %v1913, 0.0
          %vm1946 = vcmp.gt.f32.partialorder %v1914, 0.0
          %vm1947 = vcmp.gt.f32.partialorder %v1915, 0.0
          %vm1948 = vcmp.gt.f32.partialorder %v1916, 0.0
          %vm1949 = vcmp.gt.f32.partialorder %v1917, 0.0
          %vm1950 = vcmp.gt.f32.partialorder %v1918, 0.0
          %vm1951 = vcmp.gt.f32.partialorder %v1919, 0.0
          %vm1952 = vcmp.gt.f32.partialorder %v1920, 0.0
          %vm1953 = vcmp.gt.f32.partialorder %v1921, 0.0
          %vm1954 = vcmp.gt.f32.partialorder %v1922, 0.0
          %vm1955 = vcmp.gt.f32.partialorder %v1923, 0.0
          %vm1956 = vcmp.gt.f32.partialorder %v1924, 0.0
          %vm1957 = vcmp.gt.f32.partialorder %v1925, 0.0
          %vm1958 = vcmp.gt.f32.partialorder %v1926, 0.0
          %vm1959 = vcmp.gt.f32.partialorder %v1927, 0.0
          %vm1960 = vcmp.gt.f32.partialorder %v1928, 0.0
          %vm1961 = vcmp.gt.f32.partialorder %v1929, 0.0
          %vm1962 = vcmp.gt.f32.partialorder %v1930, 0.0
          %vm1963 = vcmp.gt.f32.partialorder %v1931, 0.0
          %vm1964 = vcmp.gt.f32.partialorder %v1932, 0.0
          %vm1965 = vcmp.gt.f32.partialorder %v1933, 0.0
          %vm1966 = vcmp.gt.f32.partialorder %v1934, 0.0
          %vm1967 = vcmp.gt.f32.partialorder %v1935, 0.0
          %vm1968 = vcmp.gt.f32.partialorder %v1936, 0.0
          %vm1969 = vcmp.gt.f32.partialorder %v1937, 0.0
          %vm1970 = vcmp.gt.f32.partialorder %v1938, 0.0
          %vm1971 = vcmp.gt.f32.partialorder %v1939, 0.0
          %v1972 = vmul.f32 %v1908, 0.01
          %v1973 = vmul.f32 %v1909, 0.01
          %v1974 = vmul.f32 %v1910, 0.01
          %v1975 = vmul.f32 %v1911, 0.01
          %v1976 = vmul.f32 %v1912, 0.01
          %v1977 = vmul.f32 %v1913, 0.01
          %v1978 = vmul.f32 %v1914, 0.01
          %v1979 = vmul.f32 %v1915, 0.01
          %v1980 = vmul.f32 %v1916, 0.01
          %v1981 = vmul.f32 %v1917, 0.01
          %v1982 = vmul.f32 %v1918, 0.01
          %v1983 = vmul.f32 %v1919, 0.01
          %v1984 = vmul.f32 %v1920, 0.01
          %v1985 = vmul.f32 %v1921, 0.01
          %v1986 = vmul.f32 %v1922, 0.01
          %v1987 = vmul.f32 %v1923, 0.01
          %v1988 = vmul.f32 %v1924, 0.01
          %v1989 = vmul.f32 %v1925, 0.01
          %v1990 = vmul.f32 %v1926, 0.01
          %v1991 = vmul.f32 %v1927, 0.01
          %v1992 = vmul.f32 %v1928, 0.01
          %v1993 = vmul.f32 %v1929, 0.01
          %v1994 = vmul.f32 %v1930, 0.01
          %v1995 = vmul.f32 %v1931, 0.01
          %v1996 = vmul.f32 %v1932, 0.01
          %v1997 = vmul.f32 %v1933, 0.01
          %v1998 = vmul.f32 %v1934, 0.01
          %v1999 = vmul.f32 %v1935, 0.01
          %v2000 = vmul.f32 %v1936, 0.01
          %v2001 = vmul.f32 %v1937, 0.01
          %v2002 = vmul.f32 %v1938, 0.01
          %v2003 = vmul.f32 %v1939, 0.01
          %v2004 = vsel %vm1940, %v1908, %v1972
          %v2005 = vsel %vm1941, %v1909, %v1973
          %v2006 = vsel %vm1942, %v1910, %v1974
          %v2007 = vsel %vm1943, %v1911, %v1975
          %v2008 = vsel %vm1944, %v1912, %v1976
          %v2009 = vsel %vm1945, %v1913, %v1977
          %v2010 = vsel %vm1946, %v1914, %v1978
          %v2011 = vsel %vm1947, %v1915, %v1979
          %v2012 = vsel %vm1948, %v1916, %v1980
          %v2013 = vsel %vm1949, %v1917, %v1981
          %v2014 = vsel %vm1950, %v1918, %v1982
          %v2015 = vsel %vm1951, %v1919, %v1983
          %v2016 = vsel %vm1952, %v1920, %v1984
          %v2017 = vsel %vm1953, %v1921, %v1985
          %v2018 = vsel %vm1954, %v1922, %v1986
          %v2019 = vsel %vm1955, %v1923, %v1987
          %v2020 = vsel %vm1956, %v1924, %v1988
          %v2021 = vsel %vm1957, %v1925, %v1989
          %v2022 = vsel %vm1958, %v1926, %v1990
          %v2023 = vsel %vm1959, %v1927, %v1991
          %v2024 = vsel %vm1960, %v1928, %v1992
          %v2025 = vsel %vm1961, %v1929, %v1993
          %v2026 = vsel %vm1962, %v1930, %v1994
          %v2027 = vsel %vm1963, %v1931, %v1995
          %v2028 = vsel %vm1964, %v1932, %v1996
          %v2029 = vsel %vm1965, %v1933, %v1997
          %v2030 = vsel %vm1966, %v1934, %v1998
          %v2031 = vsel %vm1967, %v1935, %v1999
          %v2032 = vsel %vm1968, %v1936, %v2000
          %v2033 = vsel %vm1969, %v1937, %v2001
          %v2034 = vsel %vm1970, %v1938, %v2002
          %v2035 = vsel %vm1971, %v1939, %v2003
          %v2036 = vpack.c.bf16 %v2005, %v2004
          %v2037 = vpack.c.bf16 %v2007, %v2006
          %v2038 = vpack.c.bf16 %v2009, %v2008
          %v2039 = vpack.c.bf16 %v2011, %v2010
          %v2040 = vpack.c.bf16 %v2013, %v2012
          %v2041 = vpack.c.bf16 %v2015, %v2014
          %v2042 = vpack.c.bf16 %v2017, %v2016
          %v2043 = vpack.c.bf16 %v2019, %v2018
          %v2044 = vpack.c.bf16 %v2021, %v2020
          %v2045 = vpack.c.bf16 %v2023, %v2022
          %v2046 = vpack.c.bf16 %v2025, %v2024
          %v2047 = vpack.c.bf16 %v2027, %v2026
          %v2048 = vpack.c.bf16 %v2029, %v2028
          %v2049 = vpack.c.bf16 %v2031, %v2030
          %v2050 = vpack.c.bf16 %v2033, %v2032
          %v2051 = vpack.c.bf16 %v2035, %v2034
          %v2052 = vld [vmem:[#allocation4] sm:$0xff]
          %v2053 = vld [vmem:[#allocation4 + $0x8] sm:$0xff]
          %v2054 = vld [vmem:[#allocation4 + $0x10] sm:$0xff]
          %v2055 = vld [vmem:[#allocation4 + $0x18] sm:$0xff]
          %v2056 = vld [vmem:[#allocation4 + $0x20] sm:$0xff]
          %v2057 = vld [vmem:[#allocation4 + $0x28] sm:$0xff]
          %v2058 = vld [vmem:[#allocation4 + $0x30] sm:$0xff]
          %v2059 = vld [vmem:[#allocation4 + $0x38] sm:$0xff]
          %v2060 = vld [vmem:[#allocation4 + $0x40] sm:$0xff]
          %v2061 = vld [vmem:[#allocation4 + $0x48] sm:$0xff]
          %v2062 = vld [vmem:[#allocation4 + $0x50] sm:$0xff]
          %v2063 = vld [vmem:[#allocation4 + $0x58] sm:$0xff]
          %v2064 = vld [vmem:[#allocation4 + $0x60] sm:$0xff]
          %v2065 = vld [vmem:[#allocation4 + $0x68] sm:$0xff]
          %v2066 = vld [vmem:[#allocation4 + $0x70] sm:$0xff]
          %v2067 = vld [vmem:[#allocation4 + $0x78] sm:$0xff]
          %2068 = vxpose.xlu0.c.b16.start [1/8] %v2036, 128
          %2069 = vxpose.xlu0.c.b16.cont [2/8] %v2037, 128
          %2070 = vxpose.xlu0.c.b16.cont [3/8] %v2038, 128
          %2071 = vxpose.xlu0.c.b16.cont [4/8] %v2039, 128
          %2072 = vxpose.xlu0.c.b16.cont [5/8] %v2040, 128
          %2073 = vxpose.xlu0.c.b16.cont [6/8] %v2041, 128
          %2074 = vxpose.xlu0.c.b16.cont [7/8] %v2042, 128
          %2075 = vxpose.xlu0.c.b16.end [8/8] %v2043, 128
          %v2076 = vpop.trf.xlu0
          %v2077 = vpop.trf.xlu0
          %v2078 = vpop.trf.xlu0
          %v2079 = vpop.trf.xlu0
          %v2080 = vpop.trf.xlu0
          %v2081 = vpop.trf.xlu0
          %v2082 = vpop.trf.xlu0
          %v2083 = vpop.trf.xlu0
          %2084 = vxpose.xlu0.c.b16.start [1/8] %v2044, 128
          %2085 = vxpose.xlu0.c.b16.cont [2/8] %v2045, 128
          %2086 = vxpose.xlu0.c.b16.cont [3/8] %v2046, 128
          %2087 = vxpose.xlu0.c.b16.cont [4/8] %v2047, 128
          %2088 = vxpose.xlu0.c.b16.cont [5/8] %v2048, 128
          %2089 = vxpose.xlu0.c.b16.cont [6/8] %v2049, 128
          %2090 = vxpose.xlu0.c.b16.cont [7/8] %v2050, 128
          %2091 = vxpose.xlu0.c.b16.end [8/8] %v2051, 128
          %v2092 = vpop.trf.xlu0
          %v2093 = vpop.trf.xlu0
          %v2094 = vpop.trf.xlu0
          %v2095 = vpop.trf.xlu0
          %v2096 = vpop.trf.xlu0
          %v2097 = vpop.trf.xlu0
          %v2098 = vpop.trf.xlu0
          %v2099 = vpop.trf.xlu0
          %2100 = vmatprep.subr.bf16.mxu0 0
          %2101 = vmatpush1.bf16.msra.mxu0 %v2043
          %2102 = vmatprep.subr.bf16.mxu0 0
          %2103 = vmatpush1.bf16.msra.mxu0 %v2042
          %2104 = vmatprep.subr.bf16.mxu0 0
          %2105 = vmatpush1.bf16.msra.mxu0 %v2041
          %2106 = vmatprep.subr.bf16.mxu0 0
          %2107 = vmatpush1.bf16.msra.mxu0 %v2040
          %2108 = vmatprep.subr.bf16.mxu0 0
          %2109 = vmatpush1.bf16.msra.mxu0 %v2039
          %2110 = vmatprep.subr.bf16.mxu0 0
          %2111 = vmatpush1.bf16.msra.mxu0 %v2038
          %2112 = vmatprep.subr.bf16.mxu0 0
          %2113 = vmatpush1.bf16.msra.mxu0 %v2037
          %2114 = vmatprep.subr.bf16.mxu0 0
          %2115 = vmatpush1.bf16.msra.mxu0 %v2036
          %2116 = vmatprep.subr.bf16.mxu0 0
          %2117 = vmatpush2.bf16.msra.mxu0 %v2051
          %2118 = vmatprep.subr.bf16.mxu0 0
          %2119 = vmatpush2.bf16.msra.mxu0 %v2050
          %2120 = vmatprep.subr.bf16.mxu0 0
          %2121 = vmatpush2.bf16.msra.mxu0 %v2049
          %2122 = vmatprep.subr.bf16.mxu0 0
          %2123 = vmatpush2.bf16.msra.mxu0 %v2048
          %2124 = vmatprep.subr.bf16.mxu0 0
          %2125 = vmatpush2.bf16.msra.mxu0 %v2047
          %2126 = vmatprep.subr.bf16.mxu0 0
          %2127 = vmatpush2.bf16.msra.mxu0 %v2046
          %2128 = vmatprep.subr.bf16.mxu0 0
          %2129 = vmatpush2.bf16.msra.mxu0 %v2045
          %2130 = vmatprep.subr.bf16.mxu0 0
          %2131 = vmatpush2.bf16.msra.mxu0 %v2044
          %2132 = vmatprep.mubr.bf16.mxu0 %v2092
          %2133 = vmatmul.mubr.bf16.gmra.mxu0 %v2076
          %v2134 = vpop.f32.mrf.mxu0
          %v2135 = vadd.f32 0.0, %v2134
          %v2136 = vpop.f32.mrf.mxu0
          %v2137 = vpop.f32.mrf.mxu0
          %v2138 = vadd.f32 0.0, %v2137
          %v2139 = vpop.f32.mrf.mxu0
          %2140 = vmatprep.mubr.bf16.mxu0 %v2093
          %2141 = vmatmul.mubr.bf16.gmra.mxu0 %v2077
          %v2142 = vpop.f32.mrf.mxu0
          %v2143 = vadd.f32 0.0, %v2142
          %v2144 = vpop.f32.mrf.mxu0
          %v2145 = vpop.f32.mrf.mxu0
          %v2146 = vadd.f32 0.0, %v2145
          %v2147 = vpop.f32.mrf.mxu0
          %2148 = vmatprep.mubr.bf16.mxu0 %v2094
          %2149 = vmatmul.mubr.bf16.gmra.mxu0 %v2078
          %v2150 = vpop.f32.mrf.mxu0
          %v2151 = vadd.f32 0.0, %v2150
          %v2152 = vpop.f32.mrf.mxu0
          %v2153 = vpop.f32.mrf.mxu0
          %v2154 = vadd.f32 0.0, %v2153
          %v2155 = vpop.f32.mrf.mxu0
          %2156 = vmatprep.mubr.bf16.mxu0 %v2095
          %2157 = vmatmul.mubr.bf16.gmra.mxu0 %v2079
          %v2158 = vpop.f32.mrf.mxu0
          %v2159 = vadd.f32 0.0, %v2158
          %v2160 = vpop.f32.mrf.mxu0
          %v2161 = vpop.f32.mrf.mxu0
          %v2162 = vadd.f32 0.0, %v2161
          %v2163 = vpop.f32.mrf.mxu0
          %2164 = vmatprep.mubr.bf16.mxu0 %v2096
          %2165 = vmatmul.mubr.bf16.gmra.mxu0 %v2080
          %v2166 = vpop.f32.mrf.mxu0
          %v2167 = vadd.f32 0.0, %v2166
          %v2168 = vpop.f32.mrf.mxu0
          %v2169 = vpop.f32.mrf.mxu0
          %v2170 = vadd.f32 0.0, %v2169
          %v2171 = vpop.f32.mrf.mxu0
          %2172 = vmatprep.mubr.bf16.mxu0 %v2097
          %2173 = vmatmul.mubr.bf16.gmra.mxu0 %v2081
          %v2174 = vpop.f32.mrf.mxu0
          %v2175 = vadd.f32 0.0, %v2174
          %v2176 = vpop.f32.mrf.mxu0
          %v2177 = vpop.f32.mrf.mxu0
          %v2178 = vadd.f32 0.0, %v2177
          %v2179 = vpop.f32.mrf.mxu0
          %2180 = vmatprep.mubr.bf16.mxu0 %v2098
          %2181 = vmatmul.mubr.bf16.gmra.mxu0 %v2082
          %v2182 = vpop.f32.mrf.mxu0
          %v2183 = vadd.f32 0.0, %v2182
          %v2184 = vpop.f32.mrf.mxu0
          %v2185 = vpop.f32.mrf.mxu0
          %v2186 = vadd.f32 0.0, %v2185
          %v2187 = vpop.f32.mrf.mxu0
          %2188 = vmatprep.mubr.bf16.mxu0 %v2099
          %2189 = vmatmul.mubr.bf16.gmra.mxu0 %v2083
          %v2190 = vpop.f32.mrf.mxu0
          %v2191 = vadd.f32 0.0, %v2190
          %v2192 = vpop.f32.mrf.mxu0
          %v2193 = vpop.f32.mrf.mxu0
          %v2194 = vadd.f32 0.0, %v2193
          %v2195 = vpop.f32.mrf.mxu0
          %2196 = vdwg.mxu0
          %v2197 = vadd.f32 %v2052, %v2135
          %v2198 = vadd.f32 %v2053, %v2138
          %v2199 = vadd.f32 %v2054, %v2143
          %v2200 = vadd.f32 %v2055, %v2146
          %v2201 = vadd.f32 %v2056, %v2151
          %v2202 = vadd.f32 %v2057, %v2154
          %v2203 = vadd.f32 %v2058, %v2159
          %v2204 = vadd.f32 %v2059, %v2162
          %v2205 = vadd.f32 %v2060, %v2167
          %v2206 = vadd.f32 %v2061, %v2170
          %v2207 = vadd.f32 %v2062, %v2175
          %v2208 = vadd.f32 %v2063, %v2178
          %v2209 = vadd.f32 %v2064, %v2183
          %v2210 = vadd.f32 %v2065, %v2186
          %v2211 = vadd.f32 %v2066, %v2191
          %v2212 = vadd.f32 %v2067, %v2194
          %2213 = vst [vmem:[#allocation4] sm:$0xff] %v2197
          %2214 = vst [vmem:[#allocation4 + $0x8] sm:$0xff] %v2198
          %2215 = vst [vmem:[#allocation4 + $0x10] sm:$0xff] %v2199
          %2216 = vst [vmem:[#allocation4 + $0x18] sm:$0xff] %v2200
          %2217 = vst [vmem:[#allocation4 + $0x20] sm:$0xff] %v2201
          %2218 = vst [vmem:[#allocation4 + $0x28] sm:$0xff] %v2202
          %2219 = vst [vmem:[#allocation4 + $0x30] sm:$0xff] %v2203
          %2220 = vst [vmem:[#allocation4 + $0x38] sm:$0xff] %v2204
          %2221 = vst [vmem:[#allocation4 + $0x40] sm:$0xff] %v2205
          %2222 = vst [vmem:[#allocation4 + $0x48] sm:$0xff] %v2206
          %2223 = vst [vmem:[#allocation4 + $0x50] sm:$0xff] %v2207
          %2224 = vst [vmem:[#allocation4 + $0x58] sm:$0xff] %v2208
          %2225 = vst [vmem:[#allocation4 + $0x60] sm:$0xff] %v2209
          %2226 = vst [vmem:[#allocation4 + $0x68] sm:$0xff] %v2210
          %2227 = vst [vmem:[#allocation4 + $0x70] sm:$0xff] %v2211
          %2228 = vst [vmem:[#allocation4 + $0x78] sm:$0xff] %v2212
        $region88: #{tpu_custom_call.1} parent=59 // pred_fallthru
          _
        // Predicated region
        $region89: #{tpu_custom_call.1} parent=59 // pred_check
          _
        $region90: #{tpu_custom_call.1} parent=59 // pred_check_branch
          %2230 = sbr.rel (%p908) target = $region92
        $region91: #{tpu_custom_call.1} parent=59 // pred_region
          %v2231 = vld [vmem:[#allocation4] sm:$0xff]
          %v2232 = vld [vmem:[#allocation4 + $0x8] sm:$0xff]
          %v2233 = vld [vmem:[#allocation4 + $0x10] sm:$0xff]
          %v2234 = vld [vmem:[#allocation4 + $0x18] sm:$0xff]
          %v2235 = vld [vmem:[#allocation4 + $0x20] sm:$0xff]
          %v2236 = vld [vmem:[#allocation4 + $0x28] sm:$0xff]
          %v2237 = vld [vmem:[#allocation4 + $0x30] sm:$0xff]
          %v2238 = vld [vmem:[#allocation4 + $0x38] sm:$0xff]
          %v2239 = vld [vmem:[#allocation4 + $0x40] sm:$0xff]
          %v2240 = vld [vmem:[#allocation4 + $0x48] sm:$0xff]
          %v2241 = vld [vmem:[#allocation4 + $0x50] sm:$0xff]
          %v2242 = vld [vmem:[#allocation4 + $0x58] sm:$0xff]
          %v2243 = vld [vmem:[#allocation4 + $0x60] sm:$0xff]
          %v2244 = vld [vmem:[#allocation4 + $0x68] sm:$0xff]
          %v2245 = vld [vmem:[#allocation4 + $0x70] sm:$0xff]
          %v2246 = vld [vmem:[#allocation4 + $0x78] sm:$0xff]
          %v2247 = vpack.c.bf16 %v2232, %v2231
          %v2248 = vpack.c.bf16 %v2234, %v2233
          %v2249 = vpack.c.bf16 %v2236, %v2235
          %v2250 = vpack.c.bf16 %v2238, %v2237
          %v2251 = vpack.c.bf16 %v2240, %v2239
          %v2252 = vpack.c.bf16 %v2242, %v2241
          %v2253 = vpack.c.bf16 %v2244, %v2243
          %v2254 = vpack.c.bf16 %v2246, %v2245
          %v2255 = vld [vmem:[#allocation8] sm:$0xf]
          %v2256 = vld [vmem:[#allocation8 + $0x4] sm:$0xf]
          %v2257 = vld [vmem:[#allocation8 + $0x8] sm:$0xf]
          %v2258 = vld [vmem:[#allocation8 + $0xc] sm:$0xf]
          %v2259 = vld [vmem:[#allocation8 + $0x10] sm:$0xf]
          %v2260 = vld [vmem:[#allocation8 + $0x14] sm:$0xf]
          %v2261 = vld [vmem:[#allocation8 + $0x18] sm:$0xf]
          %v2262 = vld [vmem:[#allocation8 + $0x1c] sm:$0xf]
          %v2263 = vld [vmem:[#allocation8 + $0x20] sm:$0xf]
          %v2264 = vld [vmem:[#allocation8 + $0x24] sm:$0xf]
          %v2265 = vld [vmem:[#allocation8 + $0x28] sm:$0xf]
          %v2266 = vld [vmem:[#allocation8 + $0x2c] sm:$0xf]
          %v2267 = vld [vmem:[#allocation8 + $0x30] sm:$0xf]
          %v2268 = vld [vmem:[#allocation8 + $0x34] sm:$0xf]
          %v2269 = vld [vmem:[#allocation8 + $0x38] sm:$0xf]
          %v2270 = vld [vmem:[#allocation8 + $0x3c] sm:$0xf]
          %v2271 = vld [vmem:[%s8] sm:$0x1]
          %v2273 = vlaneseq
          %v2274 = vshrl.u32 %v2273, 7
          %v2275 = vsub.s32 0, %v2274
          %v2276 = vrot.slane %v2271, %v2275
          %v2294 = vunpack.c.l.b16 %v2255
          %v2295 = vunpack.c.l.b16 %v2256
          %v2296 = vunpack.c.l.b16 %v2257
          %v2297 = vunpack.c.l.b16 %v2258
          %v2298 = vunpack.c.l.b16 %v2259
          %v2299 = vunpack.c.l.b16 %v2260
          %v2300 = vunpack.c.l.b16 %v2261
          %v2301 = vunpack.c.l.b16 %v2262
          %v2302 = vunpack.c.l.b16 %v2263
          %v2303 = vunpack.c.l.b16 %v2264
          %v2304 = vunpack.c.l.b16 %v2265
          %v2305 = vunpack.c.l.b16 %v2266
          %v2306 = vunpack.c.l.b16 %v2267
          %v2307 = vunpack.c.l.b16 %v2268
          %v2308 = vunpack.c.l.b16 %v2269
          %v2309 = vunpack.c.l.b16 %v2270
          %v2310 = vpack.c.b16 %v2295, %v2294
          %v2311 = vpack.c.b16 %v2297, %v2296
          %v2312 = vpack.c.b16 %v2299, %v2298
          %v2313 = vpack.c.b16 %v2301, %v2300
          %v2314 = vpack.c.b16 %v2303, %v2302
          %v2315 = vpack.c.b16 %v2305, %v2304
          %v2316 = vpack.c.b16 %v2307, %v2306
          %v2317 = vpack.c.b16 %v2309, %v2308
          %2326 = vmatprep.subr.bf16.mxu0 0
          %2327 = vmatpush1.bf16.xpose.msra.mxu0 %v2317
          %2328 = vmatprep.subr.bf16.mxu0 0
          %2329 = vmatpush1.bf16.xpose.msra.mxu0 %v2316
          %2330 = vmatprep.subr.bf16.mxu0 0
          %2331 = vmatpush1.bf16.xpose.msra.mxu0 %v2315
          %2332 = vmatprep.subr.bf16.mxu0 0
          %2333 = vmatpush1.bf16.xpose.msra.mxu0 %v2314
          %2334 = vmatprep.subr.bf16.mxu0 0
          %2335 = vmatpush1.bf16.xpose.msra.mxu0 %v2313
          %2336 = vmatprep.subr.bf16.mxu0 0
          %2337 = vmatpush1.bf16.xpose.msra.mxu0 %v2312
          %2338 = vmatprep.subr.bf16.mxu0 0
          %2339 = vmatpush1.bf16.xpose.msra.mxu0 %v2311
          %2340 = vmatprep.subr.bf16.mxu0 0
          %2341 = vmatpush1.bf16.xpose.msra.mxu0 %v2310
          %2342 = vmatprep.subr.bf16.mxu0 0
          %2343 = vmatpush2.bf16.xpose.msra.mxu0 0
          %2344 = vmatprep.subr.bf16.mxu0 0
          %2345 = vmatpush2.bf16.xpose.msra.mxu0 0
          %2346 = vmatprep.subr.bf16.mxu0 0
          %2347 = vmatpush2.bf16.xpose.msra.mxu0 0
          %2348 = vmatprep.subr.bf16.mxu0 0
          %2349 = vmatpush2.bf16.xpose.msra.mxu0 0
          %2350 = vmatprep.subr.bf16.mxu0 0
          %2351 = vmatpush2.bf16.xpose.msra.mxu0 0
          %2352 = vmatprep.subr.bf16.mxu0 0
          %2353 = vmatpush2.bf16.xpose.msra.mxu0 0
          %2354 = vmatprep.subr.bf16.mxu0 0
          %2355 = vmatpush2.bf16.xpose.msra.mxu0 0
          %2356 = vmatprep.subr.bf16.mxu0 0
          %2357 = vmatpush2.bf16.xpose.msra.mxu0 0
          %2358 = vmatprep.mubr.bf16.mxu0 0
          %2359 = vmatmul.mubr.bf16.gmra.mxu0 %v2247
          %v2360 = vpop.f32.mrf.mxu0
          %v2361 = vadd.f32 %v2276, %v2360
          %v2362 = vpop.f32.mrf.mxu0
          %v2363 = vpop.f32.mrf.mxu0
          %v2364 = vadd.f32 %v2276, %v2363
          %v2365 = vpop.f32.mrf.mxu0
          %2366 = vmatprep.mubr.bf16.mxu0 0
          %2367 = vmatmul.mubr.bf16.gmra.mxu0 %v2248
          %v2368 = vpop.f32.mrf.mxu0
          %v2369 = vadd.f32 %v2276, %v2368
          %v2370 = vpop.f32.mrf.mxu0
          %v2371 = vpop.f32.mrf.mxu0
          %v2372 = vadd.f32 %v2276, %v2371
          %v2373 = vpop.f32.mrf.mxu0
          %2374 = vmatprep.mubr.bf16.mxu0 0
          %2375 = vmatmul.mubr.bf16.gmra.mxu0 %v2249
          %v2376 = vpop.f32.mrf.mxu0
          %v2377 = vadd.f32 %v2276, %v2376
          %v2378 = vpop.f32.mrf.mxu0
          %v2379 = vpop.f32.mrf.mxu0
          %v2380 = vadd.f32 %v2276, %v2379
          %v2381 = vpop.f32.mrf.mxu0
          %2382 = vmatprep.mubr.bf16.mxu0 0
          %2383 = vmatmul.mubr.bf16.gmra.mxu0 %v2250
          %v2384 = vpop.f32.mrf.mxu0
          %v2385 = vadd.f32 %v2276, %v2384
          %v2386 = vpop.f32.mrf.mxu0
          %v2387 = vpop.f32.mrf.mxu0
          %v2388 = vadd.f32 %v2276, %v2387
          %v2389 = vpop.f32.mrf.mxu0
          %2390 = vmatprep.mubr.bf16.mxu0 0
          %2391 = vmatmul.mubr.bf16.gmra.mxu0 %v2251
          %v2392 = vpop.f32.mrf.mxu0
          %v2393 = vadd.f32 %v2276, %v2392
          %v2394 = vpop.f32.mrf.mxu0
          %v2395 = vpop.f32.mrf.mxu0
          %v2396 = vadd.f32 %v2276, %v2395
          %v2397 = vpop.f32.mrf.mxu0
          %2398 = vmatprep.mubr.bf16.mxu0 0
          %2399 = vmatmul.mubr.bf16.gmra.mxu0 %v2252
          %v2400 = vpop.f32.mrf.mxu0
          %v2401 = vadd.f32 %v2276, %v2400
          %v2402 = vpop.f32.mrf.mxu0
          %v2403 = vpop.f32.mrf.mxu0
          %v2404 = vadd.f32 %v2276, %v2403
          %v2405 = vpop.f32.mrf.mxu0
          %2406 = vmatprep.mubr.bf16.mxu0 0
          %2407 = vmatmul.mubr.bf16.gmra.mxu0 %v2253
          %v2408 = vpop.f32.mrf.mxu0
          %v2409 = vadd.f32 %v2276, %v2408
          %v2410 = vpop.f32.mrf.mxu0
          %v2411 = vpop.f32.mrf.mxu0
          %v2412 = vadd.f32 %v2276, %v2411
          %v2413 = vpop.f32.mrf.mxu0
          %2414 = vmatprep.mubr.bf16.mxu0 0
          %2415 = vmatmul.mubr.bf16.gmra.mxu0 %v2254
          %v2416 = vpop.f32.mrf.mxu0
          %v2417 = vadd.f32 %v2276, %v2416
          %v2418 = vpop.f32.mrf.mxu0
          %v2419 = vpop.f32.mrf.mxu0
          %v2420 = vadd.f32 %v2276, %v2419
          %v2421 = vpop.f32.mrf.mxu0
          %2422 = vdwg.mxu0
          %vm2423 = vcmp.gt.f32.partialorder %v2361, 0.0
          %vm2424 = vcmp.gt.f32.partialorder %v2364, 0.0
          %vm2425 = vcmp.gt.f32.partialorder %v2369, 0.0
          %vm2426 = vcmp.gt.f32.partialorder %v2372, 0.0
          %vm2427 = vcmp.gt.f32.partialorder %v2377, 0.0
          %vm2428 = vcmp.gt.f32.partialorder %v2380, 0.0
          %vm2429 = vcmp.gt.f32.partialorder %v2385, 0.0
          %vm2430 = vcmp.gt.f32.partialorder %v2388, 0.0
          %vm2431 = vcmp.gt.f32.partialorder %v2393, 0.0
          %vm2432 = vcmp.gt.f32.partialorder %v2396, 0.0
          %vm2433 = vcmp.gt.f32.partialorder %v2401, 0.0
          %vm2434 = vcmp.gt.f32.partialorder %v2404, 0.0
          %vm2435 = vcmp.gt.f32.partialorder %v2409, 0.0
          %vm2436 = vcmp.gt.f32.partialorder %v2412, 0.0
          %vm2437 = vcmp.gt.f32.partialorder %v2417, 0.0
          %vm2438 = vcmp.gt.f32.partialorder %v2420, 0.0
          %v2439 = vmul.f32 %v2361, 0.01
          %v2440 = vmul.f32 %v2364, 0.01
          %v2441 = vmul.f32 %v2369, 0.01
          %v2442 = vmul.f32 %v2372, 0.01
          %v2443 = vmul.f32 %v2377, 0.01
          %v2444 = vmul.f32 %v2380, 0.01
          %v2445 = vmul.f32 %v2385, 0.01
          %v2446 = vmul.f32 %v2388, 0.01
          %v2447 = vmul.f32 %v2393, 0.01
          %v2448 = vmul.f32 %v2396, 0.01
          %v2449 = vmul.f32 %v2401, 0.01
          %v2450 = vmul.f32 %v2404, 0.01
          %v2451 = vmul.f32 %v2409, 0.01
          %v2452 = vmul.f32 %v2412, 0.01
          %v2453 = vmul.f32 %v2417, 0.01
          %v2454 = vmul.f32 %v2420, 0.01
          %v2455 = vsel %vm2423, %v2361, %v2439
          %v2456 = vsel %vm2424, %v2364, %v2440
          %v2457 = vsel %vm2425, %v2369, %v2441
          %v2458 = vsel %vm2426, %v2372, %v2442
          %v2459 = vsel %vm2427, %v2377, %v2443
          %v2460 = vsel %vm2428, %v2380, %v2444
          %v2461 = vsel %vm2429, %v2385, %v2445
          %v2462 = vsel %vm2430, %v2388, %v2446
          %v2463 = vsel %vm2431, %v2393, %v2447
          %v2464 = vsel %vm2432, %v2396, %v2448
          %v2465 = vsel %vm2433, %v2401, %v2449
          %v2466 = vsel %vm2434, %v2404, %v2450
          %v2467 = vsel %vm2435, %v2409, %v2451
          %v2468 = vsel %vm2436, %v2412, %v2452
          %v2469 = vsel %vm2437, %v2417, %v2453
          %v2470 = vsel %vm2438, %v2420, %v2454
          %2471 = vst [vmem:[#allocation11] sm:$0xff] %v2455
          %2472 = vst [vmem:[#allocation11 + $0x8] sm:$0xff] %v2456
          %2473 = vst [vmem:[#allocation11 + $0x10] sm:$0xff] %v2457
          %2474 = vst [vmem:[#allocation11 + $0x18] sm:$0xff] %v2458
          %2475 = vst [vmem:[#allocation11 + $0x20] sm:$0xff] %v2459
          %2476 = vst [vmem:[#allocation11 + $0x28] sm:$0xff] %v2460
          %2477 = vst [vmem:[#allocation11 + $0x30] sm:$0xff] %v2461
          %2478 = vst [vmem:[#allocation11 + $0x38] sm:$0xff] %v2462
          %2479 = vst [vmem:[#allocation11 + $0x40] sm:$0xff] %v2463
          %2480 = vst [vmem:[#allocation11 + $0x48] sm:$0xff] %v2464
          %2481 = vst [vmem:[#allocation11 + $0x50] sm:$0xff] %v2465
          %2482 = vst [vmem:[#allocation11 + $0x58] sm:$0xff] %v2466
          %2483 = vst [vmem:[#allocation11 + $0x60] sm:$0xff] %v2467
          %2484 = vst [vmem:[#allocation11 + $0x68] sm:$0xff] %v2468
          %2485 = vst [vmem:[#allocation11 + $0x70] sm:$0xff] %v2469
          %2486 = vst [vmem:[#allocation11 + $0x78] sm:$0xff] %v2470
        $region92: #{tpu_custom_call.1} parent=59 // pred_fallthru
          _
        // Predicated region
        $region93: #{tpu_custom_call.1} parent=59 // pred_check
          %p2487 = pneg %p291
        $region94: #{tpu_custom_call.1} parent=59 // pred_check_branch
          %2489 = sbr.rel (%p2487) target = $region96
        $region95: #{tpu_custom_call.1} parent=59 // pred_region
          %s2491 = ssub.s32 2048, 2048
          %2492 = vsyncadd [#allocation7], %s2491
          %s2493 = sshll.u32 [#allocation11], 4
          %s2494 = int_to_ptr.vmem [resolvable:$true] %s2493
          %2499 = dma.vmem_to_hbm [thread:$0]  %s2494, 2048, %s10, [#allocation7], 128, 128, 8
        $region96: #{tpu_custom_call.1} parent=59 // pred_fallthru
          _
        // Predicated region
        $region97: #{tpu_custom_call.1} parent=59 // pred_check
          %p2500 = pneg %p291
        $region98: #{tpu_custom_call.1} parent=59 // pred_check_branch
          %2502 = sbr.rel (%p2500) target = $region100
        $region99: #{tpu_custom_call.1} parent=59 // pred_region
          %2503 = dma.done [#allocation7], 2048
        $region100: #{tpu_custom_call.1} parent=59 // pred_fallthru
          _
      $region60: #{tpu_custom_call.1} parent=5 // pred_fallthru
        _
      %p2504 = scmp.le.s32.totalorder 2, %s19
      // Predicated region
      $region101: #{tpu_custom_call.1} parent=5 // pred_check
        %p2505 = pneg %p2504
      $region102: #{tpu_custom_call.1} parent=5 // pred_check_branch
        %2507 = sbr.rel (%p2505) target = $region104
      $region103: #{tpu_custom_call.1} parent=5 // pred_region
        %s2508 = ssub.s32 %s19, 2
      $region104: #{tpu_custom_call.1} parent=5 // pred_fallthru
        _
    $region6: #{tpu_custom_call.1} parent=1 // loop_footer
      %s23 = sadd.s32 1, %s19
    $region7: #{tpu_custom_call.1} parent=1 // loop_footer_branch
      %18 = sbr.rel target = $region3
    $region8: #{tpu_custom_call.1} parent=1 // loop_exit
      _
    %2509 = vsyncpa [#allocation6], 1
    %s2510 = scalar_lea.sflag [#allocation6], 1
    %2511 = vsyncpa %s2510, 1
    %2512 = vsyncpa [#allocation9], 1
    %2513 = vsyncpa [#allocation7], 1
    %s2514 = scalar_lea.sflag [#allocation7], 1
    %2515 = vsyncpa %s2514, 1

</llo_original>
